<compile_context>
chip_gen: v7x
topology: tpu7x:2x2x1
jax: 0.10.0
libtpu: 0.0.40
codegen_flags: <defaults>
</compile_context>

<pallas_src>
import jax
import jax.numpy as jnp
import numpy as np
from jax.experimental import pallas as pl
from jax.experimental.pallas import tpu as pltpu


def tinyml_encoder_kernel(x_ref, w1_ref, b1_ref, w2_ref, b2_ref, wfc_ref, bfc_ref,
                          out_ref, xpad_ref, h1_ref, hppad_ref, h2_ref):
    # x_ref:   (BT*L, Cin)  flattened batch block (length on sublanes, channels on lanes)
    # w1_ref:  (3, Cin, C1) conv1 taps; w2_ref: (3, C1, C2); wfc_ref: (C2, D)
    # out_ref: (BT, D)
    # scratch: xpad (BT*L+2, Cin), h1 (BT*L, C1), hppad (BT*Lp+2, C1), h2 (BT*Lp, C2)
    RL, Cin = x_ref.shape
    C1 = w1_ref.shape[2]
    C2 = w2_ref.shape[2]
    BT = out_ref.shape[0]
    L = RL // BT
    Lp = L // 2
    RP = BT * Lp

    x = x_ref[...]                                                   # (RL, Cin)

    # ---- Conv1d(Cin -> C1, k=3, pad=1) ----
    # Stage x once into a scratch with one pad row on each side; +/-1 shifted reads give
    # x[l-1] / x[l+1].  Rows that would cross a batch-element boundary are zeroed with a
    # cheap iota%L mask (this also covers the two pad rows, zeroed defensively below).
    xpad_ref[pl.ds(0, 1), :] = jnp.zeros((1, Cin), jnp.float32)
    xpad_ref[pl.ds(RL + 1, 1), :] = jnp.zeros((1, Cin), jnp.float32)
    xpad_ref[pl.ds(1, RL), :] = x

    pos1 = jax.lax.broadcasted_iota(jnp.int32, (RL, Cin), 0) % L
    x_m1 = jnp.where(pos1 != 0, xpad_ref[pl.ds(0, RL), :], 0.0)      # x[l-1]
    x_p1 = jnp.where(pos1 != L - 1, xpad_ref[pl.ds(2, RL), :], 0.0)  # x[l+1]

    h1 = (jnp.dot(x_m1, w1_ref[0], preferred_element_type=jnp.float32)
          + jnp.dot(x, w1_ref[1], preferred_element_type=jnp.float32)
          + jnp.dot(x_p1, w1_ref[2], preferred_element_type=jnp.float32)
          + b1_ref[...])
    h1 = jnp.maximum(h1, 0.0)                                        # (RL, C1)

    # ---- MaxPool1d(kernel_size=2, stride=2): two stride-2 sublane reads ----
    h1_ref[...] = h1
    hp = jnp.maximum(h1_ref[pl.ds(0, RP, stride=2), :],
                     h1_ref[pl.ds(1, RP, stride=2), :])              # (RP, C1)

    # ---- Conv1d(C1 -> C2, k=3, pad=1) ----
    hppad_ref[pl.ds(0, 1), :] = jnp.zeros((1, C1), jnp.float32)
    hppad_ref[pl.ds(RP + 1, 1), :] = jnp.zeros((1, C1), jnp.float32)
    hppad_ref[pl.ds(1, RP), :] = hp

    pos2 = jax.lax.broadcasted_iota(jnp.int32, (RP, C1), 0) % Lp
    hp_m1 = jnp.where(pos2 != 0, hppad_ref[pl.ds(0, RP), :], 0.0)
    hp_p1 = jnp.where(pos2 != Lp - 1, hppad_ref[pl.ds(2, RP), :], 0.0)

    h2 = (jnp.dot(hp_m1, w2_ref[0], preferred_element_type=jnp.float32)
          + jnp.dot(hp, w2_ref[1], preferred_element_type=jnp.float32)
          + jnp.dot(hp_p1, w2_ref[2], preferred_element_type=jnp.float32)
          + b2_ref[...])
    h2 = jnp.maximum(h2, 0.0)                                        # (RP, C2)

    # ---- AdaptiveAvgPool1d(1) + Linear(C2 -> D), fused ----
    # Per-element column sums via Lp stride-Lp reads -> (BT, C2), then a single MXU
    # matmul and one batched (BT, D) store.
    h2_ref[...] = h2
    acc = h2_ref[pl.ds(0, BT, stride=Lp), :]
    for r in range(1, Lp):
        acc = acc + h2_ref[pl.ds(r, BT, stride=Lp), :]
    pooled = acc * (1.0 / Lp)                                        # (BT, C2)

    out_ref[...] = (jnp.dot(pooled, wfc_ref[...], preferred_element_type=jnp.float32)
                    + bfc_ref[...])                                  # (BT, D)


def tinyml_encoder(x, W1, B1, W2, B2, Wfc, Bfc, *, block_b=None):
    """x: (B, L, Cin).  PyTorch parameter layout: W1 (C1,Cin,3), W2 (C2,C1,3), Wfc (D,C2)."""
    B, L, Cin = x.shape
    C1 = W1.shape[0]
    C2 = W2.shape[0]
    D = Wfc.shape[0]
    assert L % 2 == 0, "MaxPool1d(kernel_size=2) path assumes even L"

    if block_b is None:
        block_b = min(64, 8 * ((B + 7) // 8))    # >= 8 elements per grid step, <= 64
    BT = block_b
    n_blocks = (B + BT - 1) // BT
    B_pad = n_blocks * BT

    xf = x.astype(jnp.float32)
    if B_pad != B:
        xf = jnp.concatenate([xf, jnp.zeros((B_pad - B, L, Cin), jnp.float32)], axis=0)
    x2d = xf.reshape(B_pad * L, Cin)             # flattened (batch*length, channels)

    # Conv taps as per-tap (C_in, C_out) matrices; Linear as (C2, D).
    w1_taps = jnp.transpose(W1, (2, 1, 0)).astype(jnp.float32)       # (3, Cin, C1)
    w2_taps = jnp.transpose(W2, (2, 1, 0)).astype(jnp.float32)       # (3, C1, C2)
    wfc_k = jnp.transpose(Wfc, (1, 0)).astype(jnp.float32)           # (C2, D)
    b1_k = B1.reshape(1, C1).astype(jnp.float32)
    b2_k = B2.reshape(1, C2).astype(jnp.float32)
    bfc_k = Bfc.reshape(1, D).astype(jnp.float32)

    RL = BT * L
    RP = BT * (L // 2)

    out = pl.pallas_call(
        tinyml_encoder_kernel,
        out_shape=jax.ShapeDtypeStruct((B_pad, D), jnp.float32),
        grid=(n_blocks,),
        in_specs=[
            pl.BlockSpec((RL, Cin), lambda b: (b, 0)),
            pl.BlockSpec((3, Cin, C1), lambda b: (0, 0, 0)),
            pl.BlockSpec((1, C1), lambda b: (0, 0)),
            pl.BlockSpec((3, C1, C2), lambda b: (0, 0, 0)),
            pl.BlockSpec((1, C2), lambda b: (0, 0)),
            pl.BlockSpec((C2, D), lambda b: (0, 0)),
            pl.BlockSpec((1, D), lambda b: (0, 0)),
        ],
        out_specs=pl.BlockSpec((BT, D), lambda b: (b, 0)),
        scratch_shapes=[
            pltpu.VMEM((RL + 2, Cin), jnp.float32),   # padded conv1 input
            pltpu.VMEM((RL, C1), jnp.float32),        # conv1 activations (maxpool reads)
            pltpu.VMEM((RP + 2, C1), jnp.float32),    # padded conv2 input
            pltpu.VMEM((RP, C2), jnp.float32),        # conv2 activations (avgpool reads)
        ],
        compiler_params=pltpu.CompilerParams(dimension_semantics=("parallel",)),
    )(x2d, w1_taps, b1_k, w2_taps, b2_k, wfc_k, bfc_k)
    return out[:B]


def ref_forward(x, W1, B1, W2, B2, Wfc, Bfc):
    """Pure-JAX reference matching the PyTorch forward exactly."""
    xt = jnp.transpose(x, (0, 2, 1))                                   # (B, Cin, L)
    h = jax.lax.conv_general_dilated(xt, W1, (1,), [(1, 1)],
                                     dimension_numbers=('NCH', 'OIH', 'NCH'))
    h = jnp.maximum(h + B1[None, :, None], 0.0)                        # (B, C1, L)
    Bn, C1n, Ln = h.shape
    h = jnp.max(h.reshape(Bn, C1n, Ln // 2, 2), axis=-1)               # MaxPool1d(2)
    h = jax.lax.conv_general_dilated(h, W2, (1,), [(1, 1)],
                                     dimension_numbers=('NCH', 'OIH', 'NCH'))
    h = jnp.maximum(h + B2[None, :, None], 0.0)                        # (B, C2, L//2)
    h = jnp.mean(h, axis=-1)                                           # AdaptiveAvgPool1d(1)
    return h @ Wfc.T + Bfc[None, :]


if __name__ == "__main__":
    B, L, Cin = 2, 16, 1
    C1, C2, D = 8, 16, 32

    key = jax.random.PRNGKey(0)
    ks = jax.random.split(key, 8)
    # deterministic synthetic parameters (PyTorch-layout shapes from __init__)
    W1 = jax.random.uniform(ks[0], (C1, Cin, 3), jnp.float32, -0.5, 0.5)
    B1 = jax.random.uniform(ks[1], (C1,), jnp.float32, -0.5, 0.5)
    W2 = jax.random.uniform(ks[2], (C2, C1, 3), jnp.float32, -0.2, 0.2)
    B2 = jax.random.uniform(ks[3], (C2,), jnp.float32, -0.2, 0.2)
    Wfc = jax.random.uniform(ks[4], (D, C2), jnp.float32, -0.25, 0.25)
    Bfc = jax.random.uniform(ks[5], (D,), jnp.float32, -0.25, 0.25)
    x = jax.random.normal(ks[6], (B, L, Cin), jnp.float32)

    out = tinyml_encoder(x, W1, B1, W2, B2, Wfc, Bfc)
    out = jax.block_until_ready(out)

    ref = jax.block_until_ready(ref_forward(x, W1, B1, W2, B2, Wfc, Bfc))
    assert out.shape == (B, D), out.shape
    assert np.allclose(np.asarray(out), np.asarray(ref), atol=1e-4, rtol=1e-4), (
        np.max(np.abs(np.asarray(out) - np.asarray(ref))))

    print("KERNEL_OK")
</pallas_src>

<mosaic_0001>
module attributes {stable_mosaic.version = 11 : i64} {
  func.func @tinyml_encoder_kernel(%arg0: i32, %arg1: memref<128x1xf32, #tpu.memory_space<vmem>>, %arg2: memref<3x1x8xf32, #tpu.memory_space<vmem>>, %arg3: memref<1x8xf32, #tpu.memory_space<vmem>>, %arg4: memref<3x8x16xf32, #tpu.memory_space<vmem>>, %arg5: memref<1x16xf32, #tpu.memory_space<vmem>>, %arg6: memref<16x32xf32, #tpu.memory_space<vmem>>, %arg7: memref<1x32xf32, #tpu.memory_space<vmem>>, %arg8: memref<8x32xf32, #tpu.memory_space<vmem>>, %arg9: memref<130x1xf32, #tpu.memory_space<vmem>>, %arg10: memref<128x8xf32, #tpu.memory_space<vmem>>, %arg11: memref<66x8xf32, #tpu.memory_space<vmem>>, %arg12: memref<64x16xf32, #tpu.memory_space<vmem>>) attributes {dimension_semantics = [#tpu.dimension_semantics<parallel>], iteration_bounds = array<i64: 1>, scalar_prefetch = 0 : i64, scratch_operands = 4 : i64, tpu.core_type = #tpu.core_type<tc>, window_params = [{transform_indices = @transform_0, window_bounds = array<i64: 128, 1>}, {pipeline_mode = #tpu.pipeline_mode<synchronous>, transform_indices = @transform_1, window_bounds = array<i64: 3, 1, 8>}, {pipeline_mode = #tpu.pipeline_mode<synchronous>, transform_indices = @transform_2, window_bounds = array<i64: 1, 8>}, {pipeline_mode = #tpu.pipeline_mode<synchronous>, transform_indices = @transform_3, window_bounds = array<i64: 3, 8, 16>}, {pipeline_mode = #tpu.pipeline_mode<synchronous>, transform_indices = @transform_4, window_bounds = array<i64: 1, 16>}, {pipeline_mode = #tpu.pipeline_mode<synchronous>, transform_indices = @transform_5, window_bounds = array<i64: 16, 32>}, {pipeline_mode = #tpu.pipeline_mode<synchronous>, transform_indices = @transform_6, window_bounds = array<i64: 1, 32>}, {transform_indices = @transform_7, window_bounds = array<i64: 8, 32>}]} {
    %c0 = arith.constant 0 : index
    %c0_0 = arith.constant 0 : index
    %0 = vector.load %arg1[%c0, %c0_0] : memref<128x1xf32, #tpu.memory_space<vmem>>, vector<128x1xf32>
    %cst = arith.constant 0.000000e+00 : f32
    %1 = vector.broadcast %cst : f32 to vector<1x1xf32>
    %c0_1 = arith.constant 0 : index
    %c0_2 = arith.constant 0 : index
    %2 = vector.load %arg9[%c0_1, %c0_2] : memref<130x1xf32, #tpu.memory_space<vmem>>, vector<1x1xf32>
    tpu.vector_store %arg9[%c0_1, %c0_2], %1 {strides = array<i32>} : memref<130x1xf32, #tpu.memory_space<vmem>>, vector<1x1xf32>,
    %cst_3 = arith.constant 0.000000e+00 : f32
    %3 = vector.broadcast %cst_3 : f32 to vector<1x1xf32>
    %c129 = arith.constant 129 : index
    %c0_4 = arith.constant 0 : index
    %4 = vector.load %arg9[%c129, %c0_4] : memref<130x1xf32, #tpu.memory_space<vmem>>, vector<1x1xf32>
    tpu.vector_store %arg9[%c129, %c0_4], %3 {strides = array<i32>} : memref<130x1xf32, #tpu.memory_space<vmem>>, vector<1x1xf32>,
    %c1 = arith.constant 1 : index
    %c0_5 = arith.constant 0 : index
    %5 = vector.load %arg9[%c1, %c0_5] : memref<130x1xf32, #tpu.memory_space<vmem>>, vector<128x1xf32>
    tpu.vector_store %arg9[%c1, %c0_5], %0 {strides = array<i32>} : memref<130x1xf32, #tpu.memory_space<vmem>>, vector<128x1xf32>,
    %6 = tpu.iota {dimensions = array<i32: 0>} : vector<128x1xi32>
    %c16_i32 = arith.constant 16 : i32
    %c0_i32 = arith.constant 0 : i32
    %7 = arith.cmpi eq, %c16_i32, %c0_i32 : i32
    %c1_i32 = arith.constant 1 : i32
    %8 = arith.select %7, %c1_i32, %c16_i32 : i32
    %9 = vector.broadcast %8 : i32 to vector<128x1xi32>
    %10 = arith.remsi %6, %9 : vector<128x1xi32>
    %c0_i32_6 = arith.constant 0 : i32
    %11 = vector.broadcast %c0_i32_6 : i32 to vector<128x1xi32>
    %12 = arith.cmpi ne, %10, %11 : vector<128x1xi32>
    %c0_i32_7 = arith.constant 0 : i32
    %13 = vector.broadcast %c0_i32_7 : i32 to vector<128x1xi32>
    %14 = arith.cmpi slt, %10, %13 : vector<128x1xi32>
    %c0_i32_8 = arith.constant 0 : i32
    %15 = arith.cmpi slt, %8, %c0_i32_8 : i32
    %16 = vector.broadcast %15 : i1 to vector<128x1xi1>
    %17 = vector.broadcast %16 : vector<128x1xi1> to vector<128x1xi1>
    %18 = arith.xori %14, %17 : vector<128x1xi1>
    %19 = arith.andi %18, %12 : vector<128x1xi1>
    %20 = vector.broadcast %8 : i32 to vector<128x1xi32>
    %21 = arith.addi %10, %20 : vector<128x1xi32>
    %22 = arith.select %19, %21, %10 : vector<128x1xi1>, vector<128x1xi32>
    %c0_i32_9 = arith.constant 0 : i32
    %23 = vector.broadcast %c0_i32_9 : i32 to vector<128x1xi32>
    %24 = arith.cmpi ne, %22, %23 : vector<128x1xi32>
    %c0_10 = arith.constant 0 : index
    %c0_11 = arith.constant 0 : index
    %25 = vector.load %arg9[%c0_10, %c0_11] : memref<130x1xf32, #tpu.memory_space<vmem>>, vector<128x1xf32>
    %cst_12 = arith.constant 0.000000e+00 : f32
    %26 = vector.broadcast %cst_12 : f32 to vector<128x1xf32>
    %27 = arith.select %24, %25, %26 : vector<128x1xi1>, vector<128x1xf32>
    %c15_i32 = arith.constant 15 : i32
    %28 = vector.broadcast %c15_i32 : i32 to vector<128x1xi32>
    %29 = arith.cmpi ne, %22, %28 : vector<128x1xi32>
    %c2 = arith.constant 2 : index
    %c0_13 = arith.constant 0 : index
    %30 = vector.load %arg9[%c2, %c0_13] : memref<130x1xf32, #tpu.memory_space<vmem>>, vector<128x1xf32>
    %cst_14 = arith.constant 0.000000e+00 : f32
    %31 = vector.broadcast %cst_14 : f32 to vector<128x1xf32>
    %32 = arith.select %29, %30, %31 : vector<128x1xi1>, vector<128x1xf32>
    %c0_15 = arith.constant 0 : index
    %c0_16 = arith.constant 0 : index
    %c0_17 = arith.constant 0 : index
    %33 = vector.load %arg2[%c0_15, %c0_16, %c0_17] : memref<3x1x8xf32, #tpu.memory_space<vmem>>, vector<1x1x8xf32>
    %34 = vector.shape_cast %33 : vector<1x1x8xf32> to vector<1x8xf32>
    %cst_18 = arith.constant dense<0.000000e+00> : vector<128x8xf32>
    %35 = tpu.matmul %27, %34, %cst_18 {dimension_numbers = #tpu.dot_dimension_numbers<[1], [0], [0], [1], [0, 0, 1, 1], [], []>} : vector<128x1xf32>, vector<1x8xf32>, vector<128x8xf32> -> vector<128x8xf32>
    %c1_19 = arith.constant 1 : index
    %c0_20 = arith.constant 0 : index
    %c0_21 = arith.constant 0 : index
    %36 = vector.load %arg2[%c1_19, %c0_20, %c0_21] : memref<3x1x8xf32, #tpu.memory_space<vmem>>, vector<1x1x8xf32>
    %37 = vector.shape_cast %36 : vector<1x1x8xf32> to vector<1x8xf32>
    %cst_22 = arith.constant dense<0.000000e+00> : vector<128x8xf32>
    %38 = tpu.matmul %0, %37, %cst_22 {dimension_numbers = #tpu.dot_dimension_numbers<[1], [0], [0], [1], [0, 0, 1, 1], [], []>} : vector<128x1xf32>, vector<1x8xf32>, vector<128x8xf32> -> vector<128x8xf32>
    %39 = arith.addf %35, %38 : vector<128x8xf32>
    %c2_23 = arith.constant 2 : index
    %c0_24 = arith.constant 0 : index
    %c0_25 = arith.constant 0 : index
    %40 = vector.load %arg2[%c2_23, %c0_24, %c0_25] : memref<3x1x8xf32, #tpu.memory_space<vmem>>, vector<1x1x8xf32>
    %41 = vector.shape_cast %40 : vector<1x1x8xf32> to vector<1x8xf32>
    %cst_26 = arith.constant dense<0.000000e+00> : vector<128x8xf32>
    %42 = tpu.matmul %32, %41, %cst_26 {dimension_numbers = #tpu.dot_dimension_numbers<[1], [0], [0], [1], [0, 0, 1, 1], [], []>} : vector<128x1xf32>, vector<1x8xf32>, vector<128x8xf32> -> vector<128x8xf32>
    %43 = arith.addf %39, %42 : vector<128x8xf32>
    %c0_27 = arith.constant 0 : index
    %c0_28 = arith.constant 0 : index
    %44 = vector.load %arg3[%c0_27, %c0_28] : memref<1x8xf32, #tpu.memory_space<vmem>>, vector<1x8xf32>
    %45 = vector.broadcast %44 : vector<1x8xf32> to vector<128x8xf32>
    %46 = arith.addf %43, %45 : vector<128x8xf32>
    %cst_29 = arith.constant 0.000000e+00 : f32
    %47 = vector.broadcast %cst_29 : f32 to vector<128x8xf32>
    %48 = arith.maximumf %46, %47 : vector<128x8xf32>
    %c0_30 = arith.constant 0 : index
    %c0_31 = arith.constant 0 : index
    %49 = vector.load %arg10[%c0_30, %c0_31] : memref<128x8xf32, #tpu.memory_space<vmem>>, vector<128x8xf32>
    tpu.vector_store %arg10[%c0_30, %c0_31], %48 {strides = array<i32>} : memref<128x8xf32, #tpu.memory_space<vmem>>, vector<128x8xf32>,
    %c0_32 = arith.constant 0 : index
    %c0_33 = arith.constant 0 : index
    %50 = tpu.strided_load %arg10[%c0_32, %c0_33] {strides = array<i32: 2, 1>} : memref<128x8xf32, #tpu.memory_space<vmem>>, vector<64x8xf32>
    %c1_34 = arith.constant 1 : index
    %c0_35 = arith.constant 0 : index
    %51 = tpu.strided_load %arg10[%c1_34, %c0_35] {strides = array<i32: 2, 1>} : memref<128x8xf32, #tpu.memory_space<vmem>>, vector<64x8xf32>
    %52 = arith.maximumf %50, %51 : vector<64x8xf32>
    %cst_36 = arith.constant 0.000000e+00 : f32
    %53 = vector.broadcast %cst_36 : f32 to vector<1x8xf32>
    %c0_37 = arith.constant 0 : index
    %c0_38 = arith.constant 0 : index
    %54 = vector.load %arg11[%c0_37, %c0_38] : memref<66x8xf32, #tpu.memory_space<vmem>>, vector<1x8xf32>
    tpu.vector_store %arg11[%c0_37, %c0_38], %53 {strides = array<i32>} : memref<66x8xf32, #tpu.memory_space<vmem>>, vector<1x8xf32>,
    %cst_39 = arith.constant 0.000000e+00 : f32
    %55 = vector.broadcast %cst_39 : f32 to vector<1x8xf32>
    %c65 = arith.constant 65 : index
    %c0_40 = arith.constant 0 : index
    %56 = vector.load %arg11[%c65, %c0_40] : memref<66x8xf32, #tpu.memory_space<vmem>>, vector<1x8xf32>
    tpu.vector_store %arg11[%c65, %c0_40], %55 {strides = array<i32>} : memref<66x8xf32, #tpu.memory_space<vmem>>, vector<1x8xf32>,
    %c1_41 = arith.constant 1 : index
    %c0_42 = arith.constant 0 : index
    %57 = vector.load %arg11[%c1_41, %c0_42] : memref<66x8xf32, #tpu.memory_space<vmem>>, vector<64x8xf32>
    tpu.vector_store %arg11[%c1_41, %c0_42], %52 {strides = array<i32>} : memref<66x8xf32, #tpu.memory_space<vmem>>, vector<64x8xf32>,
    %58 = tpu.iota {dimensions = array<i32: 0>} : vector<64x8xi32>
    %c8_i32 = arith.constant 8 : i32
    %c0_i32_43 = arith.constant 0 : i32
    %59 = arith.cmpi eq, %c8_i32, %c0_i32_43 : i32
    %c1_i32_44 = arith.constant 1 : i32
    %60 = arith.select %59, %c1_i32_44, %c8_i32 : i32
    %61 = vector.broadcast %60 : i32 to vector<64x8xi32>
    %62 = arith.remsi %58, %61 : vector<64x8xi32>
    %c0_i32_45 = arith.constant 0 : i32
    %63 = vector.broadcast %c0_i32_45 : i32 to vector<64x8xi32>
    %64 = arith.cmpi ne, %62, %63 : vector<64x8xi32>
    %c0_i32_46 = arith.constant 0 : i32
    %65 = vector.broadcast %c0_i32_46 : i32 to vector<64x8xi32>
    %66 = arith.cmpi slt, %62, %65 : vector<64x8xi32>
    %c0_i32_47 = arith.constant 0 : i32
    %67 = arith.cmpi slt, %60, %c0_i32_47 : i32
    %68 = vector.broadcast %67 : i1 to vector<64x8xi1>
    %69 = vector.broadcast %68 : vector<64x8xi1> to vector<64x8xi1>
    %70 = arith.xori %66, %69 : vector<64x8xi1>
    %71 = arith.andi %70, %64 : vector<64x8xi1>
    %72 = vector.broadcast %60 : i32 to vector<64x8xi32>
    %73 = arith.addi %62, %72 : vector<64x8xi32>
    %74 = arith.select %71, %73, %62 : vector<64x8xi1>, vector<64x8xi32>
    %c0_i32_48 = arith.constant 0 : i32
    %75 = vector.broadcast %c0_i32_48 : i32 to vector<64x8xi32>
    %76 = arith.cmpi ne, %74, %75 : vector<64x8xi32>
    %c0_49 = arith.constant 0 : index
    %c0_50 = arith.constant 0 : index
    %77 = vector.load %arg11[%c0_49, %c0_50] : memref<66x8xf32, #tpu.memory_space<vmem>>, vector<64x8xf32>
    %cst_51 = arith.constant 0.000000e+00 : f32
    %78 = vector.broadcast %cst_51 : f32 to vector<64x8xf32>
    %79 = arith.select %76, %77, %78 : vector<64x8xi1>, vector<64x8xf32>
    %c7_i32 = arith.constant 7 : i32
    %80 = vector.broadcast %c7_i32 : i32 to vector<64x8xi32>
    %81 = arith.cmpi ne, %74, %80 : vector<64x8xi32>
    %c2_52 = arith.constant 2 : index
    %c0_53 = arith.constant 0 : index
    %82 = vector.load %arg11[%c2_52, %c0_53] : memref<66x8xf32, #tpu.memory_space<vmem>>, vector<64x8xf32>
    %cst_54 = arith.constant 0.000000e+00 : f32
    %83 = vector.broadcast %cst_54 : f32 to vector<64x8xf32>
    %84 = arith.select %81, %82, %83 : vector<64x8xi1>, vector<64x8xf32>
    %c0_55 = arith.constant 0 : index
    %c0_56 = arith.constant 0 : index
    %c0_57 = arith.constant 0 : index
    %85 = vector.load %arg4[%c0_55, %c0_56, %c0_57] : memref<3x8x16xf32, #tpu.memory_space<vmem>>, vector<1x8x16xf32>
    %86 = vector.shape_cast %85 : vector<1x8x16xf32> to vector<8x16xf32>
    %cst_58 = arith.constant dense<0.000000e+00> : vector<64x16xf32>
    %87 = tpu.matmul %79, %86, %cst_58 {dimension_numbers = #tpu.dot_dimension_numbers<[1], [0], [0], [1], [0, 0, 1, 1], [], []>} : vector<64x8xf32>, vector<8x16xf32>, vector<64x16xf32> -> vector<64x16xf32>
    %c1_59 = arith.constant 1 : index
    %c0_60 = arith.constant 0 : index
    %c0_61 = arith.constant 0 : index
    %88 = vector.load %arg4[%c1_59, %c0_60, %c0_61] : memref<3x8x16xf32, #tpu.memory_space<vmem>>, vector<1x8x16xf32>
    %89 = vector.shape_cast %88 : vector<1x8x16xf32> to vector<8x16xf32>
    %cst_62 = arith.constant dense<0.000000e+00> : vector<64x16xf32>
    %90 = tpu.matmul %52, %89, %cst_62 {dimension_numbers = #tpu.dot_dimension_numbers<[1], [0], [0], [1], [0, 0, 1, 1], [], []>} : vector<64x8xf32>, vector<8x16xf32>, vector<64x16xf32> -> vector<64x16xf32>
    %91 = arith.addf %87, %90 : vector<64x16xf32>
    %c2_63 = arith.constant 2 : index
    %c0_64 = arith.constant 0 : index
    %c0_65 = arith.constant 0 : index
    %92 = vector.load %arg4[%c2_63, %c0_64, %c0_65] : memref<3x8x16xf32, #tpu.memory_space<vmem>>, vector<1x8x16xf32>
    %93 = vector.shape_cast %92 : vector<1x8x16xf32> to vector<8x16xf32>
    %cst_66 = arith.constant dense<0.000000e+00> : vector<64x16xf32>
    %94 = tpu.matmul %84, %93, %cst_66 {dimension_numbers = #tpu.dot_dimension_numbers<[1], [0], [0], [1], [0, 0, 1, 1], [], []>} : vector<64x8xf32>, vector<8x16xf32>, vector<64x16xf32> -> vector<64x16xf32>
    %95 = arith.addf %91, %94 : vector<64x16xf32>
    %c0_67 = arith.constant 0 : index
    %c0_68 = arith.constant 0 : index
    %96 = vector.load %arg5[%c0_67, %c0_68] : memref<1x16xf32, #tpu.memory_space<vmem>>, vector<1x16xf32>
    %97 = vector.broadcast %96 : vector<1x16xf32> to vector<64x16xf32>
    %98 = arith.addf %95, %97 : vector<64x16xf32>
    %cst_69 = arith.constant 0.000000e+00 : f32
    %99 = vector.broadcast %cst_69 : f32 to vector<64x16xf32>
    %100 = arith.maximumf %98, %99 : vector<64x16xf32>
    %c0_70 = arith.constant 0 : index
    %c0_71 = arith.constant 0 : index
    %101 = vector.load %arg12[%c0_70, %c0_71] : memref<64x16xf32, #tpu.memory_space<vmem>>, vector<64x16xf32>
    tpu.vector_store %arg12[%c0_70, %c0_71], %100 {strides = array<i32>} : memref<64x16xf32, #tpu.memory_space<vmem>>, vector<64x16xf32>,
    %c0_72 = arith.constant 0 : index
    %c0_73 = arith.constant 0 : index
    %102 = tpu.strided_load %arg12[%c0_72, %c0_73] {strides = array<i32: 8, 1>} : memref<64x16xf32, #tpu.memory_space<vmem>>, vector<8x16xf32>
    %c1_74 = arith.constant 1 : index
    %c0_75 = arith.constant 0 : index
    %103 = tpu.strided_load %arg12[%c1_74, %c0_75] {strides = array<i32: 8, 1>} : memref<64x16xf32, #tpu.memory_space<vmem>>, vector<8x16xf32>
    %104 = arith.addf %102, %103 : vector<8x16xf32>
    %c2_76 = arith.constant 2 : index
    %c0_77 = arith.constant 0 : index
    %105 = tpu.strided_load %arg12[%c2_76, %c0_77] {strides = array<i32: 8, 1>} : memref<64x16xf32, #tpu.memory_space<vmem>>, vector<8x16xf32>
    %106 = arith.addf %104, %105 : vector<8x16xf32>
    %c3 = arith.constant 3 : index
    %c0_78 = arith.constant 0 : index
    %107 = tpu.strided_load %arg12[%c3, %c0_78] {strides = array<i32: 8, 1>} : memref<64x16xf32, #tpu.memory_space<vmem>>, vector<8x16xf32>
    %108 = arith.addf %106, %107 : vector<8x16xf32>
    %c4 = arith.constant 4 : index
    %c0_79 = arith.constant 0 : index
    %109 = tpu.strided_load %arg12[%c4, %c0_79] {strides = array<i32: 8, 1>} : memref<64x16xf32, #tpu.memory_space<vmem>>, vector<8x16xf32>
    %110 = arith.addf %108, %109 : vector<8x16xf32>
    %c5 = arith.constant 5 : index
    %c0_80 = arith.constant 0 : index
    %111 = tpu.strided_load %arg12[%c5, %c0_80] {strides = array<i32: 8, 1>} : memref<64x16xf32, #tpu.memory_space<vmem>>, vector<8x16xf32>
    %112 = arith.addf %110, %111 : vector<8x16xf32>
    %c6 = arith.constant 6 : index
    %c0_81 = arith.constant 0 : index
    %113 = tpu.strided_load %arg12[%c6, %c0_81] {strides = array<i32: 8, 1>} : memref<64x16xf32, #tpu.memory_space<vmem>>, vector<8x16xf32>
    %114 = arith.addf %112, %113 : vector<8x16xf32>
    %c7 = arith.constant 7 : index
    %c0_82 = arith.constant 0 : index
    %115 = tpu.strided_load %arg12[%c7, %c0_82] {strides = array<i32: 8, 1>} : memref<64x16xf32, #tpu.memory_space<vmem>>, vector<8x16xf32>
    %116 = arith.addf %114, %115 : vector<8x16xf32>
    %cst_83 = arith.constant 1.250000e-01 : f32
    %117 = vector.broadcast %cst_83 : f32 to vector<8x16xf32>
    %118 = arith.mulf %116, %117 : vector<8x16xf32>
    %c0_84 = arith.constant 0 : index
    %c0_85 = arith.constant 0 : index
    %119 = vector.load %arg6[%c0_84, %c0_85] : memref<16x32xf32, #tpu.memory_space<vmem>>, vector<16x32xf32>
    %cst_86 = arith.constant dense<0.000000e+00> : vector<8x32xf32>
    %120 = tpu.matmul %118, %119, %cst_86 {dimension_numbers = #tpu.dot_dimension_numbers<[1], [0], [0], [1], [0, 0, 1, 1], [], []>} : vector<8x16xf32>, vector<16x32xf32>, vector<8x32xf32> -> vector<8x32xf32>
    %c0_87 = arith.constant 0 : index
    %c0_88 = arith.constant 0 : index
    %121 = vector.load %arg7[%c0_87, %c0_88] : memref<1x32xf32, #tpu.memory_space<vmem>>, vector<1x32xf32>
    %122 = vector.broadcast %121 : vector<1x32xf32> to vector<8x32xf32>
    %123 = arith.addf %120, %122 : vector<8x32xf32>
    %c0_89 = arith.constant 0 : index
    %c0_90 = arith.constant 0 : index
    %124 = vector.load %arg8[%c0_89, %c0_90] : memref<8x32xf32, #tpu.memory_space<vmem>>, vector<8x32xf32>
    tpu.vector_store %arg8[%c0_89, %c0_90], %123 {strides = array<i32>} : memref<8x32xf32, #tpu.memory_space<vmem>>, vector<8x32xf32>,
    return
  }
  func.func @transform_0(%arg0: i32) -> (i32, i32) {
    %c0_i32 = arith.constant 0 : i32
    %c0_i32_0 = arith.constant 0 : i32
    return %arg0, %c0_i32 : i32, i32
  }
  func.func @transform_1(%arg0: i32) -> (i32, i32, i32) {
    %c0_i32 = arith.constant 0 : i32
    %c0_i32_0 = arith.constant 0 : i32
    %c0_i32_1 = arith.constant 0 : i32
    %c0_i32_2 = arith.constant 0 : i32
    return %c0_i32, %c0_i32_0, %c0_i32_1 : i32, i32, i32
  }
  func.func @transform_2(%arg0: i32) -> (i32, i32) {
    %c0_i32 = arith.constant 0 : i32
    %c0_i32_0 = arith.constant 0 : i32
    %c0_i32_1 = arith.constant 0 : i32
    return %c0_i32, %c0_i32_0 : i32, i32
  }
  func.func @transform_3(%arg0: i32) -> (i32, i32, i32) {
    %c0_i32 = arith.constant 0 : i32
    %c0_i32_0 = arith.constant 0 : i32
    %c0_i32_1 = arith.constant 0 : i32
    %c0_i32_2 = arith.constant 0 : i32
    return %c0_i32, %c0_i32_0, %c0_i32_1 : i32, i32, i32
  }
  func.func @transform_4(%arg0: i32) -> (i32, i32) {
    %c0_i32 = arith.constant 0 : i32
    %c0_i32_0 = arith.constant 0 : i32
    %c0_i32_1 = arith.constant 0 : i32
    return %c0_i32, %c0_i32_0 : i32, i32
  }
  func.func @transform_5(%arg0: i32) -> (i32, i32) {
    %c0_i32 = arith.constant 0 : i32
    %c0_i32_0 = arith.constant 0 : i32
    %c0_i32_1 = arith.constant 0 : i32
    return %c0_i32, %c0_i32_0 : i32, i32
  }
  func.func @transform_6(%arg0: i32) -> (i32, i32) {
    %c0_i32 = arith.constant 0 : i32
    %c0_i32_0 = arith.constant 0 : i32
    %c0_i32_1 = arith.constant 0 : i32
    return %c0_i32, %c0_i32_0 : i32, i32
  }
  func.func @transform_7(%arg0: i32) -> (i32, i32) {
    %c0_i32 = arith.constant 0 : i32
    %c0_i32_0 = arith.constant 0 : i32
    return %arg0, %c0_i32 : i32, i32
  }
}

</mosaic_0001>

<llo_original>
// kernel: tpu_custom_call.1
$region0: #{tpu_custom_call.1}
  #allocation0 [shape = 'u32[]', space=smem, size = 0x4, offset = 0x4, fixed_abs, tag = 'smem constant byte address 0x4 - core index']
  #allocation1 [shape = 'u32[144,128]{1,0:T(1,128)}', space=vmem, size = 0x12000, scoped, tag = 'internal scratch']
  #allocation2 [shape = 'f32[130,1]{1,0:T(8,128)}', space=vmem, size = 0x11000, scoped, tag = 'scratch operand']
  #allocation3 [shape = 'f32[128,8]{1,0:T(8,128)}', space=vmem, size = 0x10000, scoped, tag = 'scratch operand']
  #allocation4 [shape = 'f32[66,8]{1,0:T(8,128)}', space=vmem, size = 0x9000, scoped, tag = 'scratch operand']
  #allocation5 [shape = 'f32[64,16]{1,0:T(8,128)}', space=vmem, size = 0x8000, scoped, tag = 'scratch operand']
  %s0 = inlined_call_operand.vmem [shape: f32[128,1], index: 0, kind: input, shape index: {}]
  %s1 = inlined_call_operand.vmem [shape: f32[3,1,8], index: 1, kind: input, shape index: {}]
  %s2 = inlined_call_operand.vmem [shape: f32[1,8], index: 2, kind: input, shape index: {}]
  %s3 = inlined_call_operand.vmem [shape: f32[3,8,16], index: 3, kind: input, shape index: {}]
  %s4 = inlined_call_operand.vmem [shape: f32[1,16], index: 4, kind: input, shape index: {}]
  %s5 = inlined_call_operand.vmem [shape: f32[16,32], index: 5, kind: input, shape index: {}]
  %s6 = inlined_call_operand.vmem [shape: f32[1,32], index: 6, kind: input, shape index: {}]
  %s7 = inlined_call_operand.hbm [shape: f32[8,32], index: 7, kind: output, shape index: {}]
  %s8 = sld [smem:[#allocation0]]
  $region38: #{tpu_custom_call.1} parent=0
    _
  %s10 = ssub.s32 1, %s8
  %s11 = scalar_select 0, %s10, %s8
  $region1: #{tpu_custom_call.1} parent=0
    #allocation6 [shape = 'u8[4096]{0}', space=vmem, size = 0x1000, scoped, tag = 'output window, operand 0, single buffered']
    #allocation7 [shape = 's32[1]{0}', space=sflag, size = 0x4, scoped, tag = 'scoped memory for tpu_custom_call.1']
    %12 = vsyncpa [#allocation7], 0
    // Predicated region
    $region2: #{tpu_custom_call.1} parent=1 // pred_check
      _
    $region3: #{tpu_custom_call.1} parent=1 // pred_check_branch
      %14 = sbr.rel (0) target = $region5
    $region4: #{tpu_custom_call.1} parent=1 // pred_region
      _
    $region5: #{tpu_custom_call.1} parent=1 // pred_fallthru
      _
    // Predicated region
    $region6: #{tpu_custom_call.1} parent=1 // pred_check
      _
    $region7: #{tpu_custom_call.1} parent=1 // pred_check_branch
      %16 = sbr.rel (0) target = $region9
    $region8: #{tpu_custom_call.1} parent=1 // pred_region
      _
    $region9: #{tpu_custom_call.1} parent=1 // pred_fallthru
      _
    // Predicated region
    $region10: #{tpu_custom_call.1} parent=1 // pred_check
      _
    $region11: #{tpu_custom_call.1} parent=1 // pred_check_branch
      %18 = sbr.rel (0) target = $region13
    $region12: #{tpu_custom_call.1} parent=1 // pred_region
      _
    $region13: #{tpu_custom_call.1} parent=1 // pred_fallthru
      _
    // Predicated region
    $region14: #{tpu_custom_call.1} parent=1 // pred_check
      _
    $region15: #{tpu_custom_call.1} parent=1 // pred_check_branch
      %20 = sbr.rel (0) target = $region17
    $region16: #{tpu_custom_call.1} parent=1 // pred_region
      _
    $region17: #{tpu_custom_call.1} parent=1 // pred_fallthru
      _
    // Predicated region
    $region18: #{tpu_custom_call.1} parent=1 // pred_check
      _
    $region19: #{tpu_custom_call.1} parent=1 // pred_check_branch
      %22 = sbr.rel (0) target = $region21
    $region20: #{tpu_custom_call.1} parent=1 // pred_region
      _
    $region21: #{tpu_custom_call.1} parent=1 // pred_fallthru
      _
    // Predicated region
    $region22: #{tpu_custom_call.1} parent=1 // pred_check
      _
    $region23: #{tpu_custom_call.1} parent=1 // pred_check_branch
      %24 = sbr.rel (0) target = $region25
    $region24: #{tpu_custom_call.1} parent=1 // pred_region
      _
    $region25: #{tpu_custom_call.1} parent=1 // pred_fallthru
      _
    // Predicated region
    $region26: #{tpu_custom_call.1} parent=1 // pred_check
      _
    $region27: #{tpu_custom_call.1} parent=1 // pred_check_branch
      %26 = sbr.rel (0) target = $region29
    $region28: #{tpu_custom_call.1} parent=1 // pred_region
      _
    $region29: #{tpu_custom_call.1} parent=1 // pred_fallthru
      _
    %v27 = vld [vmem:[%s0] sm:$0xff]
    %v28 = vld [vmem:[%s0 + $0x8] sm:$0xff]
    %v29 = vld [vmem:[%s0 + $0x10] sm:$0xff]
    %v30 = vld [vmem:[%s0 + $0x18] sm:$0xff]
    %v31 = vld [vmem:[%s0 + $0x20] sm:$0xff]
    %v32 = vld [vmem:[%s0 + $0x28] sm:$0xff]
    %v33 = vld [vmem:[%s0 + $0x30] sm:$0xff]
    %v34 = vld [vmem:[%s0 + $0x38] sm:$0xff]
    %v35 = vld [vmem:[%s0 + $0x40] sm:$0xff]
    %v36 = vld [vmem:[%s0 + $0x48] sm:$0xff]
    %v37 = vld [vmem:[%s0 + $0x50] sm:$0xff]
    %v38 = vld [vmem:[%s0 + $0x58] sm:$0xff]
    %v39 = vld [vmem:[%s0 + $0x60] sm:$0xff]
    %v40 = vld [vmem:[%s0 + $0x68] sm:$0xff]
    %v41 = vld [vmem:[%s0 + $0x70] sm:$0xff]
    %v42 = vld [vmem:[%s0 + $0x78] sm:$0xff]
    %vm43 = vcmask 0
    %44 = vst.msk [vmem:[#allocation2] sm:$0x1] %vm43, 0.0
    %45 = vst.msk [vmem:[#allocation2 + $0x81] sm:$0x1] %vm43, 0.0
    %vm46 = vcmask 7168
    %47 = vst.msk [vmem:[#allocation2 + $0x1] sm:$0xff] %vm46, %v27
    %48 = vst.msk [vmem:[#allocation2 + $0x9] sm:$0xff] %vm46, %v28
    %49 = vst.msk [vmem:[#allocation2 + $0x11] sm:$0xff] %vm46, %v29
    %50 = vst.msk [vmem:[#allocation2 + $0x19] sm:$0xff] %vm46, %v30
    %51 = vst.msk [vmem:[#allocation2 + $0x21] sm:$0xff] %vm46, %v31
    %52 = vst.msk [vmem:[#allocation2 + $0x29] sm:$0xff] %vm46, %v32
    %53 = vst.msk [vmem:[#allocation2 + $0x31] sm:$0xff] %vm46, %v33
    %54 = vst.msk [vmem:[#allocation2 + $0x39] sm:$0xff] %vm46, %v34
    %55 = vst.msk [vmem:[#allocation2 + $0x41] sm:$0xff] %vm46, %v35
    %56 = vst.msk [vmem:[#allocation2 + $0x49] sm:$0xff] %vm46, %v36
    %57 = vst.msk [vmem:[#allocation2 + $0x51] sm:$0xff] %vm46, %v37
    %58 = vst.msk [vmem:[#allocation2 + $0x59] sm:$0xff] %vm46, %v38
    %59 = vst.msk [vmem:[#allocation2 + $0x61] sm:$0xff] %vm46, %v39
    %60 = vst.msk [vmem:[#allocation2 + $0x69] sm:$0xff] %vm46, %v40
    %61 = vst.msk [vmem:[#allocation2 + $0x71] sm:$0xff] %vm46, %v41
    %62 = vst.msk [vmem:[#allocation2 + $0x79] sm:$0xff] %vm46, %v42
    %v63 = vlaneseq
    %v64 = vshrl.u32 %v63, 7
    %v65 = vadd.s32 %v64, 8
    %v66 = vadd.s32 %v64, 16
    %v67 = vadd.s32 %v64, 24
    %v68 = vadd.s32 %v64, 32
    %v69 = vadd.s32 %v64, 40
    %v70 = vadd.s32 %v64, 48
    %v71 = vadd.s32 %v64, 56
    %v72 = vadd.s32 %v64, 64
    %v73 = vadd.s32 %v64, 72
    %v74 = vadd.s32 %v64, 80
    %v75 = vadd.s32 %v64, 88
    %v76 = vadd.s32 %v64, 96
    %v77 = vadd.s32 %v64, 104
    %v78 = vadd.s32 %v64, 112
    %v79 = vadd.s32 %v64, 120
    %vm80 = vcmp.lt.s32.totalorder %v64, 0
    %v81 = vsub.s32 0, %v64
    %v82 = vsel %vm80, %v81, %v64
    %v83 = vshrl.u32 %v82, 4
    %v84 = vand.u32 %v82, 15
    %v85 = vsub.s32 0, %v84
    %v86 = vsel %vm80, %v85, %v84
    %vm87 = vcmp.lt.s32.totalorder %v65, 0
    %v88 = vsub.s32 0, %v65
    %v89 = vsel %vm87, %v88, %v65
    %v90 = vshrl.u32 %v89, 4
    %v91 = vand.u32 %v89, 15
    %v92 = vsub.s32 0, %v91
    %v93 = vsel %vm87, %v92, %v91
    %vm94 = vcmp.lt.s32.totalorder %v66, 0
    %v95 = vsub.s32 0, %v66
    %v96 = vsel %vm94, %v95, %v66
    %v97 = vshrl.u32 %v96, 4
    %v98 = vand.u32 %v96, 15
    %v99 = vsub.s32 0, %v98
    %v100 = vsel %vm94, %v99, %v98
    %vm101 = vcmp.lt.s32.totalorder %v67, 0
    %v102 = vsub.s32 0, %v67
    %v103 = vsel %vm101, %v102, %v67
    %v104 = vshrl.u32 %v103, 4
    %v105 = vand.u32 %v103, 15
    %v106 = vsub.s32 0, %v105
    %v107 = vsel %vm101, %v106, %v105
    %vm108 = vcmp.lt.s32.totalorder %v68, 0
    %v109 = vsub.s32 0, %v68
    %v110 = vsel %vm108, %v109, %v68
    %v111 = vshrl.u32 %v110, 4
    %v112 = vand.u32 %v110, 15
    %v113 = vsub.s32 0, %v112
    %v114 = vsel %vm108, %v113, %v112
    %vm115 = vcmp.lt.s32.totalorder %v69, 0
    %v116 = vsub.s32 0, %v69
    %v117 = vsel %vm115, %v116, %v69
    %v118 = vshrl.u32 %v117, 4
    %v119 = vand.u32 %v117, 15
    %v120 = vsub.s32 0, %v119
    %v121 = vsel %vm115, %v120, %v119
    %vm122 = vcmp.lt.s32.totalorder %v70, 0
    %v123 = vsub.s32 0, %v70
    %v124 = vsel %vm122, %v123, %v70
    %v125 = vshrl.u32 %v124, 4
    %v126 = vand.u32 %v124, 15
    %v127 = vsub.s32 0, %v126
    %v128 = vsel %vm122, %v127, %v126
    %vm129 = vcmp.lt.s32.totalorder %v71, 0
    %v130 = vsub.s32 0, %v71
    %v131 = vsel %vm129, %v130, %v71
    %v132 = vshrl.u32 %v131, 4
    %v133 = vand.u32 %v131, 15
    %v134 = vsub.s32 0, %v133
    %v135 = vsel %vm129, %v134, %v133
    %vm136 = vcmp.lt.s32.totalorder %v72, 0
    %v137 = vsub.s32 0, %v72
    %v138 = vsel %vm136, %v137, %v72
    %v139 = vshrl.u32 %v138, 4
    %v140 = vand.u32 %v138, 15
    %v141 = vsub.s32 0, %v140
    %v142 = vsel %vm136, %v141, %v140
    %vm143 = vcmp.lt.s32.totalorder %v73, 0
    %v144 = vsub.s32 0, %v73
    %v145 = vsel %vm143, %v144, %v73
    %v146 = vshrl.u32 %v145, 4
    %v147 = vand.u32 %v145, 15
    %v148 = vsub.s32 0, %v147
    %v149 = vsel %vm143, %v148, %v147
    %vm150 = vcmp.lt.s32.totalorder %v74, 0
    %v151 = vsub.s32 0, %v74
    %v152 = vsel %vm150, %v151, %v74
    %v153 = vshrl.u32 %v152, 4
    %v154 = vand.u32 %v152, 15
    %v155 = vsub.s32 0, %v154
    %v156 = vsel %vm150, %v155, %v154
    %vm157 = vcmp.lt.s32.totalorder %v75, 0
    %v158 = vsub.s32 0, %v75
    %v159 = vsel %vm157, %v158, %v75
    %v160 = vshrl.u32 %v159, 4
    %v161 = vand.u32 %v159, 15
    %v162 = vsub.s32 0, %v161
    %v163 = vsel %vm157, %v162, %v161
    %vm164 = vcmp.lt.s32.totalorder %v76, 0
    %v165 = vsub.s32 0, %v76
    %v166 = vsel %vm164, %v165, %v76
    %v167 = vshrl.u32 %v166, 4
    %v168 = vand.u32 %v166, 15
    %v169 = vsub.s32 0, %v168
    %v170 = vsel %vm164, %v169, %v168
    %vm171 = vcmp.lt.s32.totalorder %v77, 0
    %v172 = vsub.s32 0, %v77
    %v173 = vsel %vm171, %v172, %v77
    %v174 = vshrl.u32 %v173, 4
    %v175 = vand.u32 %v173, 15
    %v176 = vsub.s32 0, %v175
    %v177 = vsel %vm171, %v176, %v175
    %vm178 = vcmp.lt.s32.totalorder %v78, 0
    %v179 = vsub.s32 0, %v78
    %v180 = vsel %vm178, %v179, %v78
    %v181 = vshrl.u32 %v180, 4
    %v182 = vand.u32 %v180, 15
    %v183 = vsub.s32 0, %v182
    %v184 = vsel %vm178, %v183, %v182
    %vm185 = vcmp.lt.s32.totalorder %v79, 0
    %v186 = vsub.s32 0, %v79
    %v187 = vsel %vm185, %v186, %v79
    %v188 = vshrl.u32 %v187, 4
    %v189 = vand.u32 %v187, 15
    %v190 = vsub.s32 0, %v189
    %v191 = vsel %vm185, %v190, %v189
    %vm192 = vcmp.ne.s32.totalorder %v86, 0
    %vm193 = vcmp.ne.s32.totalorder %v93, 0
    %vm194 = vcmp.ne.s32.totalorder %v100, 0
    %vm195 = vcmp.ne.s32.totalorder %v107, 0
    %vm196 = vcmp.ne.s32.totalorder %v114, 0
    %vm197 = vcmp.ne.s32.totalorder %v121, 0
    %vm198 = vcmp.ne.s32.totalorder %v128, 0
    %vm199 = vcmp.ne.s32.totalorder %v135, 0
    %vm200 = vcmp.ne.s32.totalorder %v142, 0
    %vm201 = vcmp.ne.s32.totalorder %v149, 0
    %vm202 = vcmp.ne.s32.totalorder %v156, 0
    %vm203 = vcmp.ne.s32.totalorder %v163, 0
    %vm204 = vcmp.ne.s32.totalorder %v170, 0
    %vm205 = vcmp.ne.s32.totalorder %v177, 0
    %vm206 = vcmp.ne.s32.totalorder %v184, 0
    %vm207 = vcmp.ne.s32.totalorder %v191, 0
    %vm208 = vcmp.lt.s32.totalorder %v86, 0
    %vm209 = vcmp.lt.s32.totalorder %v93, 0
    %vm210 = vcmp.lt.s32.totalorder %v100, 0
    %vm211 = vcmp.lt.s32.totalorder %v107, 0
    %vm212 = vcmp.lt.s32.totalorder %v114, 0
    %vm213 = vcmp.lt.s32.totalorder %v121, 0
    %vm214 = vcmp.lt.s32.totalorder %v128, 0
    %vm215 = vcmp.lt.s32.totalorder %v135, 0
    %vm216 = vcmp.lt.s32.totalorder %v142, 0
    %vm217 = vcmp.lt.s32.totalorder %v149, 0
    %vm218 = vcmp.lt.s32.totalorder %v156, 0
    %vm219 = vcmp.lt.s32.totalorder %v163, 0
    %vm220 = vcmp.lt.s32.totalorder %v170, 0
    %vm221 = vcmp.lt.s32.totalorder %v177, 0
    %vm222 = vcmp.lt.s32.totalorder %v184, 0
    %vm223 = vcmp.lt.s32.totalorder %v191, 0
    %vm224 = vmand %vm208, %vm192
    %vm225 = vmand %vm209, %vm193
    %vm226 = vmand %vm210, %vm194
    %vm227 = vmand %vm211, %vm195
    %vm228 = vmand %vm212, %vm196
    %vm229 = vmand %vm213, %vm197
    %vm230 = vmand %vm214, %vm198
    %vm231 = vmand %vm215, %vm199
    %vm232 = vmand %vm216, %vm200
    %vm233 = vmand %vm217, %vm201
    %vm234 = vmand %vm218, %vm202
    %vm235 = vmand %vm219, %vm203
    %vm236 = vmand %vm220, %vm204
    %vm237 = vmand %vm221, %vm205
    %vm238 = vmand %vm222, %vm206
    %vm239 = vmand %vm223, %vm207
    %v240 = vadd.s32 %v86, 16
    %v241 = vadd.s32 %v93, 16
    %v242 = vadd.s32 %v100, 16
    %v243 = vadd.s32 %v107, 16
    %v244 = vadd.s32 %v114, 16
    %v245 = vadd.s32 %v121, 16
    %v246 = vadd.s32 %v128, 16
    %v247 = vadd.s32 %v135, 16
    %v248 = vadd.s32 %v142, 16
    %v249 = vadd.s32 %v149, 16
    %v250 = vadd.s32 %v156, 16
    %v251 = vadd.s32 %v163, 16
    %v252 = vadd.s32 %v170, 16
    %v253 = vadd.s32 %v177, 16
    %v254 = vadd.s32 %v184, 16
    %v255 = vadd.s32 %v191, 16
    %v256 = vsel %vm224, %v240, %v86
    %v257 = vsel %vm225, %v241, %v93
    %v258 = vsel %vm226, %v242, %v100
    %v259 = vsel %vm227, %v243, %v107
    %v260 = vsel %vm228, %v244, %v114
    %v261 = vsel %vm229, %v245, %v121
    %v262 = vsel %vm230, %v246, %v128
    %v263 = vsel %vm231, %v247, %v135
    %v264 = vsel %vm232, %v248, %v142
    %v265 = vsel %vm233, %v249, %v149
    %v266 = vsel %vm234, %v250, %v156
    %v267 = vsel %vm235, %v251, %v163
    %v268 = vsel %vm236, %v252, %v170
    %v269 = vsel %vm237, %v253, %v177
    %v270 = vsel %vm238, %v254, %v184
    %v271 = vsel %vm239, %v255, %v191
    %vm272 = vcmp.ne.s32.totalorder %v256, 0
    %vm273 = vcmp.ne.s32.totalorder %v257, 0
    %vm274 = vcmp.ne.s32.totalorder %v258, 0
    %vm275 = vcmp.ne.s32.totalorder %v259, 0
    %vm276 = vcmp.ne.s32.totalorder %v260, 0
    %vm277 = vcmp.ne.s32.totalorder %v261, 0
    %vm278 = vcmp.ne.s32.totalorder %v262, 0
    %vm279 = vcmp.ne.s32.totalorder %v263, 0
    %vm280 = vcmp.ne.s32.totalorder %v264, 0
    %vm281 = vcmp.ne.s32.totalorder %v265, 0
    %vm282 = vcmp.ne.s32.totalorder %v266, 0
    %vm283 = vcmp.ne.s32.totalorder %v267, 0
    %vm284 = vcmp.ne.s32.totalorder %v268, 0
    %vm285 = vcmp.ne.s32.totalorder %v269, 0
    %vm286 = vcmp.ne.s32.totalorder %v270, 0
    %vm287 = vcmp.ne.s32.totalorder %v271, 0
    %v288 = vld [vmem:[#allocation2] sm:$0xff]
    %v289 = vld [vmem:[#allocation2 + $0x8] sm:$0xff]
    %v290 = vld [vmem:[#allocation2 + $0x10] sm:$0xff]
    %v291 = vld [vmem:[#allocation2 + $0x18] sm:$0xff]
    %v292 = vld [vmem:[#allocation2 + $0x20] sm:$0xff]
    %v293 = vld [vmem:[#allocation2 + $0x28] sm:$0xff]
    %v294 = vld [vmem:[#allocation2 + $0x30] sm:$0xff]
    %v295 = vld [vmem:[#allocation2 + $0x38] sm:$0xff]
    %v296 = vld [vmem:[#allocation2 + $0x40] sm:$0xff]
    %v297 = vld [vmem:[#allocation2 + $0x48] sm:$0xff]
    %v298 = vld [vmem:[#allocation2 + $0x50] sm:$0xff]
    %v299 = vld [vmem:[#allocation2 + $0x58] sm:$0xff]
    %v300 = vld [vmem:[#allocation2 + $0x60] sm:$0xff]
    %v301 = vld [vmem:[#allocation2 + $0x68] sm:$0xff]
    %v302 = vld [vmem:[#allocation2 + $0x70] sm:$0xff]
    %v303 = vld [vmem:[#allocation2 + $0x78] sm:$0xff]
    %v304 = vsel %vm272, %v288, 0.0
    %v305 = vsel %vm273, %v289, 0.0
    %v306 = vsel %vm274, %v290, 0.0
    %v307 = vsel %vm275, %v291, 0.0
    %v308 = vsel %vm276, %v292, 0.0
    %v309 = vsel %vm277, %v293, 0.0
    %v310 = vsel %vm278, %v294, 0.0
    %v311 = vsel %vm279, %v295, 0.0
    %v312 = vsel %vm280, %v296, 0.0
    %v313 = vsel %vm281, %v297, 0.0
    %v314 = vsel %vm282, %v298, 0.0
    %v315 = vsel %vm283, %v299, 0.0
    %v316 = vsel %vm284, %v300, 0.0
    %v317 = vsel %vm285, %v301, 0.0
    %v318 = vsel %vm286, %v302, 0.0
    %v319 = vsel %vm287, %v303, 0.0
    %vm320 = vcmp.ne.s32.totalorder %v256, 15
    %vm321 = vcmp.ne.s32.totalorder %v257, 15
    %vm322 = vcmp.ne.s32.totalorder %v258, 15
    %vm323 = vcmp.ne.s32.totalorder %v259, 15
    %vm324 = vcmp.ne.s32.totalorder %v260, 15
    %vm325 = vcmp.ne.s32.totalorder %v261, 15
    %vm326 = vcmp.ne.s32.totalorder %v262, 15
    %vm327 = vcmp.ne.s32.totalorder %v263, 15
    %vm328 = vcmp.ne.s32.totalorder %v264, 15
    %vm329 = vcmp.ne.s32.totalorder %v265, 15
    %vm330 = vcmp.ne.s32.totalorder %v266, 15
    %vm331 = vcmp.ne.s32.totalorder %v267, 15
    %vm332 = vcmp.ne.s32.totalorder %v268, 15
    %vm333 = vcmp.ne.s32.totalorder %v269, 15
    %vm334 = vcmp.ne.s32.totalorder %v270, 15
    %vm335 = vcmp.ne.s32.totalorder %v271, 15
    %v336 = vld [vmem:[#allocation2 + $0x2] sm:$0xff]
    %v337 = vld [vmem:[#allocation2 + $0xa] sm:$0xff]
    %v338 = vld [vmem:[#allocation2 + $0x12] sm:$0xff]
    %v339 = vld [vmem:[#allocation2 + $0x1a] sm:$0xff]
    %v340 = vld [vmem:[#allocation2 + $0x22] sm:$0xff]
    %v341 = vld [vmem:[#allocation2 + $0x2a] sm:$0xff]
    %v342 = vld [vmem:[#allocation2 + $0x32] sm:$0xff]
    %v343 = vld [vmem:[#allocation2 + $0x3a] sm:$0xff]
    %v344 = vld [vmem:[#allocation2 + $0x42] sm:$0xff]
    %v345 = vld [vmem:[#allocation2 + $0x4a] sm:$0xff]
    %v346 = vld [vmem:[#allocation2 + $0x52] sm:$0xff]
    %v347 = vld [vmem:[#allocation2 + $0x5a] sm:$0xff]
    %v348 = vld [vmem:[#allocation2 + $0x62] sm:$0xff]
    %v349 = vld [vmem:[#allocation2 + $0x6a] sm:$0xff]
    %v350 = vld [vmem:[#allocation2 + $0x72] sm:$0xff]
    %v351 = vld [vmem:[#allocation2 + $0x7a] sm:$0xff]
    %v352 = vsel %vm320, %v336, 0.0
    %v353 = vsel %vm321, %v337, 0.0
    %v354 = vsel %vm322, %v338, 0.0
    %v355 = vsel %vm323, %v339, 0.0
    %v356 = vsel %vm324, %v340, 0.0
    %v357 = vsel %vm325, %v341, 0.0
    %v358 = vsel %vm326, %v342, 0.0
    %v359 = vsel %vm327, %v343, 0.0
    %v360 = vsel %vm328, %v344, 0.0
    %v361 = vsel %vm329, %v345, 0.0
    %v362 = vsel %vm330, %v346, 0.0
    %v363 = vsel %vm331, %v347, 0.0
    %v364 = vsel %vm332, %v348, 0.0
    %v365 = vsel %vm333, %v349, 0.0
    %v366 = vsel %vm334, %v350, 0.0
    %v367 = vsel %vm335, %v351, 0.0
    %v368 = vld [vmem:[%s1] sm:$0x1]
    %s369 = scalar_lea.vmem %s1, 1
    %v370 = vld [vmem:[%s369] sm:$0x1]
    %v372 = vsel %vm46, %v27, 0
    %v375 = vsel %vm46, %v28, 0
    %v378 = vsel %vm46, %v29, 0
    %v381 = vsel %vm46, %v30, 0
    %v384 = vsel %vm46, %v31, 0
    %v387 = vsel %vm46, %v32, 0
    %v390 = vsel %vm46, %v33, 0
    %v393 = vsel %vm46, %v34, 0
    %v396 = vsel %vm46, %v35, 0
    %v399 = vsel %vm46, %v36, 0
    %v402 = vsel %vm46, %v37, 0
    %v405 = vsel %vm46, %v38, 0
    %v408 = vsel %vm46, %v39, 0
    %v411 = vsel %vm46, %v40, 0
    %v414 = vsel %vm46, %v41, 0
    %v417 = vsel %vm46, %v42, 0
    %vm419 = vcmask 1040384
    %v421 = vsel %vm419, %v370, 0
    %423 = vmatprep.subr.mxu0 0.0
    %424 = vmatpush1.msra.mxu0 %v421
    %425 = vmatprep.subr.mxu0 0.0
    %426 = vmatpush1.msra.mxu0 0.0
    %427 = vmatprep.subr.mxu0 0.0
    %428 = vmatpush1.msra.mxu0 0.0
    %429 = vmatprep.subr.mxu0 0.0
    %430 = vmatpush1.msra.mxu0 0.0
    %431 = vmatprep.subr.mxu0 0.0
    %432 = vmatpush1.msra.mxu0 0.0
    %433 = vmatprep.subr.mxu0 0.0
    %434 = vmatpush1.msra.mxu0 0.0
    %435 = vmatprep.subr.mxu0 0.0
    %436 = vmatpush1.msra.mxu0 0.0
    %437 = vmatprep.subr.mxu0 0.0
    %438 = vmatpush1.msra.mxu0 0.0
    %439 = vmatprep.subr.mxu0 0.0
    %440 = vmatpush1.msra.mxu0 0.0
    %441 = vmatprep.subr.mxu0 0.0
    %442 = vmatpush1.msra.mxu0 0.0
    %443 = vmatprep.subr.mxu0 0.0
    %444 = vmatpush1.msra.mxu0 0.0
    %445 = vmatprep.subr.mxu0 0.0
    %446 = vmatpush1.msra.mxu0 0.0
    %447 = vmatprep.subr.mxu0 0.0
    %448 = vmatpush1.msra.mxu0 0.0
    %449 = vmatprep.subr.mxu0 0.0
    %450 = vmatpush1.msra.mxu0 0.0
    %451 = vmatprep.subr.mxu0 0.0
    %452 = vmatpush1.msra.mxu0 0.0
    %453 = vmatprep.subr.mxu0 0.0
    %454 = vmatpush1.msra.mxu0 0.0
    %455 = vmatprep.subr.mxu0 0.0
    %456 = vmatpush1.msra.mxu0 0.0
    %457 = vmatprep.subr.mxu0 0.0
    %458 = vmatpush1.msra.mxu0 0.0
    %459 = vmatprep.subr.mxu0 0.0
    %460 = vmatpush1.msra.mxu0 0.0
    %461 = vmatprep.subr.mxu0 0.0
    %462 = vmatpush1.msra.mxu0 0.0
    %463 = vmatprep.subr.mxu0 0.0
    %464 = vmatpush1.msra.mxu0 0.0
    %465 = vmatprep.subr.mxu0 0.0
    %466 = vmatpush1.msra.mxu0 0.0
    %467 = vmatprep.subr.mxu0 0.0
    %468 = vmatpush1.msra.mxu0 0.0
    %469 = vmatprep.subr.mxu0 0.0
    %470 = vmatpush1.msra.mxu0 0.0
    %471 = vmatprep.subr.mxu0 0.0
    %472 = vmatpush1.msra.mxu0 0.0
    %473 = vmatprep.subr.mxu0 0.0
    %474 = vmatpush1.msra.mxu0 0.0
    %475 = vmatprep.subr.mxu0 0.0
    %476 = vmatpush1.msra.mxu0 0.0
    %477 = vmatprep.subr.mxu0 0.0
    %478 = vmatpush1.msra.mxu0 0.0
    %479 = vmatprep.subr.mxu0 0.0
    %480 = vmatpush1.msra.mxu0 0.0
    %481 = vmatprep.subr.mxu0 0.0
    %482 = vmatpush1.msra.mxu0 0.0
    %483 = vmatprep.subr.mxu0 0.0
    %484 = vmatpush1.msra.mxu0 0.0
    %485 = vmatprep.subr.mxu0 0.0
    %486 = vmatpush1.msra.mxu0 0.0
    %487 = vmatprep.mubr.f32.mxu0 0.0
    %488 = vmatmul.mubr.f32.gmra.mrb[0].mxu0 %v372
    %v489 = vpop.f32.mrb[0].mxu0
    %v490 = vadd.f32 0.0, %v489
    %v491 = vpop.f32.mrb[0].mxu0
    %492 = vmatprep.mubr.f32.mxu0 0.0
    %493 = vmatmul.mubr.f32.gmra.mrb[0].mxu0 %v375
    %v494 = vpop.f32.mrb[0].mxu0
    %v495 = vadd.f32 0.0, %v494
    %v496 = vpop.f32.mrb[0].mxu0
    %497 = vmatprep.mubr.f32.mxu0 0.0
    %498 = vmatmul.mubr.f32.gmra.mrb[0].mxu0 %v378
    %v499 = vpop.f32.mrb[0].mxu0
    %v500 = vadd.f32 0.0, %v499
    %v501 = vpop.f32.mrb[0].mxu0
    %502 = vmatprep.mubr.f32.mxu0 0.0
    %503 = vmatmul.mubr.f32.gmra.mrb[0].mxu0 %v381
    %v504 = vpop.f32.mrb[0].mxu0
    %v505 = vadd.f32 0.0, %v504
    %v506 = vpop.f32.mrb[0].mxu0
    %507 = vmatprep.mubr.f32.mxu0 0.0
    %508 = vmatmul.mubr.f32.gmra.mrb[0].mxu0 %v384
    %v509 = vpop.f32.mrb[0].mxu0
    %v510 = vadd.f32 0.0, %v509
    %v511 = vpop.f32.mrb[0].mxu0
    %512 = vmatprep.mubr.f32.mxu0 0.0
    %513 = vmatmul.mubr.f32.gmra.mrb[0].mxu0 %v387
    %v514 = vpop.f32.mrb[0].mxu0
    %v515 = vadd.f32 0.0, %v514
    %v516 = vpop.f32.mrb[0].mxu0
    %517 = vmatprep.mubr.f32.mxu0 0.0
    %518 = vmatmul.mubr.f32.gmra.mrb[0].mxu0 %v390
    %v519 = vpop.f32.mrb[0].mxu0
    %v520 = vadd.f32 0.0, %v519
    %v521 = vpop.f32.mrb[0].mxu0
    %522 = vmatprep.mubr.f32.mxu0 0.0
    %523 = vmatmul.mubr.f32.gmra.mrb[0].mxu0 %v393
    %v524 = vpop.f32.mrb[0].mxu0
    %v525 = vadd.f32 0.0, %v524
    %v526 = vpop.f32.mrb[0].mxu0
    %527 = vmatprep.mubr.f32.mxu0 0.0
    %528 = vmatmul.mubr.f32.gmra.mrb[0].mxu0 %v396
    %v529 = vpop.f32.mrb[0].mxu0
    %v530 = vadd.f32 0.0, %v529
    %v531 = vpop.f32.mrb[0].mxu0
    %532 = vmatprep.mubr.f32.mxu0 0.0
    %533 = vmatmul.mubr.f32.gmra.mrb[0].mxu0 %v399
    %v534 = vpop.f32.mrb[0].mxu0
    %v535 = vadd.f32 0.0, %v534
    %v536 = vpop.f32.mrb[0].mxu0
    %537 = vmatprep.mubr.f32.mxu0 0.0
    %538 = vmatmul.mubr.f32.gmra.mrb[0].mxu0 %v402
    %v539 = vpop.f32.mrb[0].mxu0
    %v540 = vadd.f32 0.0, %v539
    %v541 = vpop.f32.mrb[0].mxu0
    %542 = vmatprep.mubr.f32.mxu0 0.0
    %543 = vmatmul.mubr.f32.gmra.mrb[0].mxu0 %v405
    %v544 = vpop.f32.mrb[0].mxu0
    %v545 = vadd.f32 0.0, %v544
    %v546 = vpop.f32.mrb[0].mxu0
    %547 = vmatprep.mubr.f32.mxu0 0.0
    %548 = vmatmul.mubr.f32.gmra.mrb[0].mxu0 %v408
    %v549 = vpop.f32.mrb[0].mxu0
    %v550 = vadd.f32 0.0, %v549
    %v551 = vpop.f32.mrb[0].mxu0
    %552 = vmatprep.mubr.f32.mxu0 0.0
    %553 = vmatmul.mubr.f32.gmra.mrb[0].mxu0 %v411
    %v554 = vpop.f32.mrb[0].mxu0
    %v555 = vadd.f32 0.0, %v554
    %v556 = vpop.f32.mrb[0].mxu0
    %557 = vmatprep.mubr.f32.mxu0 0.0
    %558 = vmatmul.mubr.f32.gmra.mrb[0].mxu0 %v414
    %v559 = vpop.f32.mrb[0].mxu0
    %v560 = vadd.f32 0.0, %v559
    %v561 = vpop.f32.mrb[0].mxu0
    %562 = vmatprep.mubr.f32.mxu0 0.0
    %563 = vmatmul.mubr.f32.gmra.mrb[0].mxu0 %v417
    %v564 = vpop.f32.mrb[0].mxu0
    %v565 = vadd.f32 0.0, %v564
    %v566 = vpop.f32.mrb[0].mxu0
    %567 = vdwg.mxu0
    %v569 = vsel %vm46, %v304, 0
    %v572 = vsel %vm46, %v305, 0
    %v575 = vsel %vm46, %v306, 0
    %v578 = vsel %vm46, %v307, 0
    %v581 = vsel %vm46, %v308, 0
    %v584 = vsel %vm46, %v309, 0
    %v587 = vsel %vm46, %v310, 0
    %v590 = vsel %vm46, %v311, 0
    %v593 = vsel %vm46, %v312, 0
    %v596 = vsel %vm46, %v313, 0
    %v599 = vsel %vm46, %v314, 0
    %v602 = vsel %vm46, %v315, 0
    %v605 = vsel %vm46, %v316, 0
    %v608 = vsel %vm46, %v317, 0
    %v611 = vsel %vm46, %v318, 0
    %v614 = vsel %vm46, %v319, 0
    %v617 = vsel %vm419, %v368, 0
    %619 = vmatprep.subr.mxu0 0.0
    %620 = vmatpush1.msra.mxu0 %v617
    %621 = vmatprep.subr.mxu0 0.0
    %622 = vmatpush1.msra.mxu0 0.0
    %623 = vmatprep.subr.mxu0 0.0
    %624 = vmatpush1.msra.mxu0 0.0
    %625 = vmatprep.subr.mxu0 0.0
    %626 = vmatpush1.msra.mxu0 0.0
    %627 = vmatprep.subr.mxu0 0.0
    %628 = vmatpush1.msra.mxu0 0.0
    %629 = vmatprep.subr.mxu0 0.0
    %630 = vmatpush1.msra.mxu0 0.0
    %631 = vmatprep.subr.mxu0 0.0
    %632 = vmatpush1.msra.mxu0 0.0
    %633 = vmatprep.subr.mxu0 0.0
    %634 = vmatpush1.msra.mxu0 0.0
    %635 = vmatprep.subr.mxu0 0.0
    %636 = vmatpush1.msra.mxu0 0.0
    %637 = vmatprep.subr.mxu0 0.0
    %638 = vmatpush1.msra.mxu0 0.0
    %639 = vmatprep.subr.mxu0 0.0
    %640 = vmatpush1.msra.mxu0 0.0
    %641 = vmatprep.subr.mxu0 0.0
    %642 = vmatpush1.msra.mxu0 0.0
    %643 = vmatprep.subr.mxu0 0.0
    %644 = vmatpush1.msra.mxu0 0.0
    %645 = vmatprep.subr.mxu0 0.0
    %646 = vmatpush1.msra.mxu0 0.0
    %647 = vmatprep.subr.mxu0 0.0
    %648 = vmatpush1.msra.mxu0 0.0
    %649 = vmatprep.subr.mxu0 0.0
    %650 = vmatpush1.msra.mxu0 0.0
    %651 = vmatprep.subr.mxu0 0.0
    %652 = vmatpush1.msra.mxu0 0.0
    %653 = vmatprep.subr.mxu0 0.0
    %654 = vmatpush1.msra.mxu0 0.0
    %655 = vmatprep.subr.mxu0 0.0
    %656 = vmatpush1.msra.mxu0 0.0
    %657 = vmatprep.subr.mxu0 0.0
    %658 = vmatpush1.msra.mxu0 0.0
    %659 = vmatprep.subr.mxu0 0.0
    %660 = vmatpush1.msra.mxu0 0.0
    %661 = vmatprep.subr.mxu0 0.0
    %662 = vmatpush1.msra.mxu0 0.0
    %663 = vmatprep.subr.mxu0 0.0
    %664 = vmatpush1.msra.mxu0 0.0
    %665 = vmatprep.subr.mxu0 0.0
    %666 = vmatpush1.msra.mxu0 0.0
    %667 = vmatprep.subr.mxu0 0.0
    %668 = vmatpush1.msra.mxu0 0.0
    %669 = vmatprep.subr.mxu0 0.0
    %670 = vmatpush1.msra.mxu0 0.0
    %671 = vmatprep.subr.mxu0 0.0
    %672 = vmatpush1.msra.mxu0 0.0
    %673 = vmatprep.subr.mxu0 0.0
    %674 = vmatpush1.msra.mxu0 0.0
    %675 = vmatprep.subr.mxu0 0.0
    %676 = vmatpush1.msra.mxu0 0.0
    %677 = vmatprep.subr.mxu0 0.0
    %678 = vmatpush1.msra.mxu0 0.0
    %679 = vmatprep.subr.mxu0 0.0
    %680 = vmatpush1.msra.mxu0 0.0
    %681 = vmatprep.subr.mxu0 0.0
    %682 = vmatpush1.msra.mxu0 0.0
    %683 = vmatprep.mubr.f32.mxu0 0.0
    %684 = vmatmul.mubr.f32.gmra.mrb[0].mxu0 %v569
    %v685 = vpop.f32.mrb[0].mxu0
    %v686 = vadd.f32 %v490, %v685
    %v687 = vpop.f32.mrb[0].mxu0
    %688 = vmatprep.mubr.f32.mxu0 0.0
    %689 = vmatmul.mubr.f32.gmra.mrb[0].mxu0 %v572
    %v690 = vpop.f32.mrb[0].mxu0
    %v691 = vadd.f32 %v495, %v690
    %v692 = vpop.f32.mrb[0].mxu0
    %693 = vmatprep.mubr.f32.mxu0 0.0
    %694 = vmatmul.mubr.f32.gmra.mrb[0].mxu0 %v575
    %v695 = vpop.f32.mrb[0].mxu0
    %v696 = vadd.f32 %v500, %v695
    %v697 = vpop.f32.mrb[0].mxu0
    %698 = vmatprep.mubr.f32.mxu0 0.0
    %699 = vmatmul.mubr.f32.gmra.mrb[0].mxu0 %v578
    %v700 = vpop.f32.mrb[0].mxu0
    %v701 = vadd.f32 %v505, %v700
    %v702 = vpop.f32.mrb[0].mxu0
    %703 = vmatprep.mubr.f32.mxu0 0.0
    %704 = vmatmul.mubr.f32.gmra.mrb[0].mxu0 %v581
    %v705 = vpop.f32.mrb[0].mxu0
    %v706 = vadd.f32 %v510, %v705
    %v707 = vpop.f32.mrb[0].mxu0
    %708 = vmatprep.mubr.f32.mxu0 0.0
    %709 = vmatmul.mubr.f32.gmra.mrb[0].mxu0 %v584
    %v710 = vpop.f32.mrb[0].mxu0
    %v711 = vadd.f32 %v515, %v710
    %v712 = vpop.f32.mrb[0].mxu0
    %713 = vmatprep.mubr.f32.mxu0 0.0
    %714 = vmatmul.mubr.f32.gmra.mrb[0].mxu0 %v587
    %v715 = vpop.f32.mrb[0].mxu0
    %v716 = vadd.f32 %v520, %v715
    %v717 = vpop.f32.mrb[0].mxu0
    %718 = vmatprep.mubr.f32.mxu0 0.0
    %719 = vmatmul.mubr.f32.gmra.mrb[0].mxu0 %v590
    %v720 = vpop.f32.mrb[0].mxu0
    %v721 = vadd.f32 %v525, %v720
    %v722 = vpop.f32.mrb[0].mxu0
    %723 = vmatprep.mubr.f32.mxu0 0.0
    %724 = vmatmul.mubr.f32.gmra.mrb[0].mxu0 %v593
    %v725 = vpop.f32.mrb[0].mxu0
    %v726 = vadd.f32 %v530, %v725
    %v727 = vpop.f32.mrb[0].mxu0
    %728 = vmatprep.mubr.f32.mxu0 0.0
    %729 = vmatmul.mubr.f32.gmra.mrb[0].mxu0 %v596
    %v730 = vpop.f32.mrb[0].mxu0
    %v731 = vadd.f32 %v535, %v730
    %v732 = vpop.f32.mrb[0].mxu0
    %733 = vmatprep.mubr.f32.mxu0 0.0
    %734 = vmatmul.mubr.f32.gmra.mrb[0].mxu0 %v599
    %v735 = vpop.f32.mrb[0].mxu0
    %v736 = vadd.f32 %v540, %v735
    %v737 = vpop.f32.mrb[0].mxu0
    %738 = vmatprep.mubr.f32.mxu0 0.0
    %739 = vmatmul.mubr.f32.gmra.mrb[0].mxu0 %v602
    %v740 = vpop.f32.mrb[0].mxu0
    %v741 = vadd.f32 %v545, %v740
    %v742 = vpop.f32.mrb[0].mxu0
    %743 = vmatprep.mubr.f32.mxu0 0.0
    %744 = vmatmul.mubr.f32.gmra.mrb[0].mxu0 %v605
    %v745 = vpop.f32.mrb[0].mxu0
    %v746 = vadd.f32 %v550, %v745
    %v747 = vpop.f32.mrb[0].mxu0
    %748 = vmatprep.mubr.f32.mxu0 0.0
    %749 = vmatmul.mubr.f32.gmra.mrb[0].mxu0 %v608
    %v750 = vpop.f32.mrb[0].mxu0
    %v751 = vadd.f32 %v555, %v750
    %v752 = vpop.f32.mrb[0].mxu0
    %753 = vmatprep.mubr.f32.mxu0 0.0
    %754 = vmatmul.mubr.f32.gmra.mrb[0].mxu0 %v611
    %v755 = vpop.f32.mrb[0].mxu0
    %v756 = vadd.f32 %v560, %v755
    %v757 = vpop.f32.mrb[0].mxu0
    %758 = vmatprep.mubr.f32.mxu0 0.0
    %759 = vmatmul.mubr.f32.gmra.mrb[0].mxu0 %v614
    %v760 = vpop.f32.mrb[0].mxu0
    %v761 = vadd.f32 %v565, %v760
    %v762 = vpop.f32.mrb[0].mxu0
    %763 = vdwg.mxu0
    %s764 = scalar_lea.vmem %s1, 2
    %v765 = vld [vmem:[%s764] sm:$0x1]
    %v767 = vsel %vm46, %v352, 0
    %v770 = vsel %vm46, %v353, 0
    %v773 = vsel %vm46, %v354, 0
    %v776 = vsel %vm46, %v355, 0
    %v779 = vsel %vm46, %v356, 0
    %v782 = vsel %vm46, %v357, 0
    %v785 = vsel %vm46, %v358, 0
    %v788 = vsel %vm46, %v359, 0
    %v791 = vsel %vm46, %v360, 0
    %v794 = vsel %vm46, %v361, 0
    %v797 = vsel %vm46, %v362, 0
    %v800 = vsel %vm46, %v363, 0
    %v803 = vsel %vm46, %v364, 0
    %v806 = vsel %vm46, %v365, 0
    %v809 = vsel %vm46, %v366, 0
    %v812 = vsel %vm46, %v367, 0
    %v815 = vsel %vm419, %v765, 0
    %817 = vmatprep.subr.mxu0 0.0
    %818 = vmatpush1.msra.mxu0 %v815
    %819 = vmatprep.subr.mxu0 0.0
    %820 = vmatpush1.msra.mxu0 0.0
    %821 = vmatprep.subr.mxu0 0.0
    %822 = vmatpush1.msra.mxu0 0.0
    %823 = vmatprep.subr.mxu0 0.0
    %824 = vmatpush1.msra.mxu0 0.0
    %825 = vmatprep.subr.mxu0 0.0
    %826 = vmatpush1.msra.mxu0 0.0
    %827 = vmatprep.subr.mxu0 0.0
    %828 = vmatpush1.msra.mxu0 0.0
    %829 = vmatprep.subr.mxu0 0.0
    %830 = vmatpush1.msra.mxu0 0.0
    %831 = vmatprep.subr.mxu0 0.0
    %832 = vmatpush1.msra.mxu0 0.0
    %833 = vmatprep.subr.mxu0 0.0
    %834 = vmatpush1.msra.mxu0 0.0
    %835 = vmatprep.subr.mxu0 0.0
    %836 = vmatpush1.msra.mxu0 0.0
    %837 = vmatprep.subr.mxu0 0.0
    %838 = vmatpush1.msra.mxu0 0.0
    %839 = vmatprep.subr.mxu0 0.0
    %840 = vmatpush1.msra.mxu0 0.0
    %841 = vmatprep.subr.mxu0 0.0
    %842 = vmatpush1.msra.mxu0 0.0
    %843 = vmatprep.subr.mxu0 0.0
    %844 = vmatpush1.msra.mxu0 0.0
    %845 = vmatprep.subr.mxu0 0.0
    %846 = vmatpush1.msra.mxu0 0.0
    %847 = vmatprep.subr.mxu0 0.0
    %848 = vmatpush1.msra.mxu0 0.0
    %849 = vmatprep.subr.mxu0 0.0
    %850 = vmatpush1.msra.mxu0 0.0
    %851 = vmatprep.subr.mxu0 0.0
    %852 = vmatpush1.msra.mxu0 0.0
    %853 = vmatprep.subr.mxu0 0.0
    %854 = vmatpush1.msra.mxu0 0.0
    %855 = vmatprep.subr.mxu0 0.0
    %856 = vmatpush1.msra.mxu0 0.0
    %857 = vmatprep.subr.mxu0 0.0
    %858 = vmatpush1.msra.mxu0 0.0
    %859 = vmatprep.subr.mxu0 0.0
    %860 = vmatpush1.msra.mxu0 0.0
    %861 = vmatprep.subr.mxu0 0.0
    %862 = vmatpush1.msra.mxu0 0.0
    %863 = vmatprep.subr.mxu0 0.0
    %864 = vmatpush1.msra.mxu0 0.0
    %865 = vmatprep.subr.mxu0 0.0
    %866 = vmatpush1.msra.mxu0 0.0
    %867 = vmatprep.subr.mxu0 0.0
    %868 = vmatpush1.msra.mxu0 0.0
    %869 = vmatprep.subr.mxu0 0.0
    %870 = vmatpush1.msra.mxu0 0.0
    %871 = vmatprep.subr.mxu0 0.0
    %872 = vmatpush1.msra.mxu0 0.0
    %873 = vmatprep.subr.mxu0 0.0
    %874 = vmatpush1.msra.mxu0 0.0
    %875 = vmatprep.subr.mxu0 0.0
    %876 = vmatpush1.msra.mxu0 0.0
    %877 = vmatprep.subr.mxu0 0.0
    %878 = vmatpush1.msra.mxu0 0.0
    %879 = vmatprep.subr.mxu0 0.0
    %880 = vmatpush1.msra.mxu0 0.0
    %881 = vmatprep.mubr.f32.mxu0 0.0
    %882 = vmatmul.mubr.f32.gmra.mrb[0].mxu0 %v767
    %v883 = vpop.f32.mrb[0].mxu0
    %v884 = vadd.f32 0.0, %v883
    %v885 = vpop.f32.mrb[0].mxu0
    %886 = vmatprep.mubr.f32.mxu0 0.0
    %887 = vmatmul.mubr.f32.gmra.mrb[0].mxu0 %v770
    %v888 = vpop.f32.mrb[0].mxu0
    %v889 = vadd.f32 0.0, %v888
    %v890 = vpop.f32.mrb[0].mxu0
    %891 = vmatprep.mubr.f32.mxu0 0.0
    %892 = vmatmul.mubr.f32.gmra.mrb[0].mxu0 %v773
    %v893 = vpop.f32.mrb[0].mxu0
    %v894 = vadd.f32 0.0, %v893
    %v895 = vpop.f32.mrb[0].mxu0
    %896 = vmatprep.mubr.f32.mxu0 0.0
    %897 = vmatmul.mubr.f32.gmra.mrb[0].mxu0 %v776
    %v898 = vpop.f32.mrb[0].mxu0
    %v899 = vadd.f32 0.0, %v898
    %v900 = vpop.f32.mrb[0].mxu0
    %901 = vmatprep.mubr.f32.mxu0 0.0
    %902 = vmatmul.mubr.f32.gmra.mrb[0].mxu0 %v779
    %v903 = vpop.f32.mrb[0].mxu0
    %v904 = vadd.f32 0.0, %v903
    %v905 = vpop.f32.mrb[0].mxu0
    %906 = vmatprep.mubr.f32.mxu0 0.0
    %907 = vmatmul.mubr.f32.gmra.mrb[0].mxu0 %v782
    %v908 = vpop.f32.mrb[0].mxu0
    %v909 = vadd.f32 0.0, %v908
    %v910 = vpop.f32.mrb[0].mxu0
    %911 = vmatprep.mubr.f32.mxu0 0.0
    %912 = vmatmul.mubr.f32.gmra.mrb[0].mxu0 %v785
    %v913 = vpop.f32.mrb[0].mxu0
    %v914 = vadd.f32 0.0, %v913
    %v915 = vpop.f32.mrb[0].mxu0
    %916 = vmatprep.mubr.f32.mxu0 0.0
    %917 = vmatmul.mubr.f32.gmra.mrb[0].mxu0 %v788
    %v918 = vpop.f32.mrb[0].mxu0
    %v919 = vadd.f32 0.0, %v918
    %v920 = vpop.f32.mrb[0].mxu0
    %921 = vmatprep.mubr.f32.mxu0 0.0
    %922 = vmatmul.mubr.f32.gmra.mrb[0].mxu0 %v791
    %v923 = vpop.f32.mrb[0].mxu0
    %v924 = vadd.f32 0.0, %v923
    %v925 = vpop.f32.mrb[0].mxu0
    %926 = vmatprep.mubr.f32.mxu0 0.0
    %927 = vmatmul.mubr.f32.gmra.mrb[0].mxu0 %v794
    %v928 = vpop.f32.mrb[0].mxu0
    %v929 = vadd.f32 0.0, %v928
    %v930 = vpop.f32.mrb[0].mxu0
    %931 = vmatprep.mubr.f32.mxu0 0.0
    %932 = vmatmul.mubr.f32.gmra.mrb[0].mxu0 %v797
    %v933 = vpop.f32.mrb[0].mxu0
    %v934 = vadd.f32 0.0, %v933
    %v935 = vpop.f32.mrb[0].mxu0
    %936 = vmatprep.mubr.f32.mxu0 0.0
    %937 = vmatmul.mubr.f32.gmra.mrb[0].mxu0 %v800
    %v938 = vpop.f32.mrb[0].mxu0
    %v939 = vadd.f32 0.0, %v938
    %v940 = vpop.f32.mrb[0].mxu0
    %941 = vmatprep.mubr.f32.mxu0 0.0
    %942 = vmatmul.mubr.f32.gmra.mrb[0].mxu0 %v803
    %v943 = vpop.f32.mrb[0].mxu0
    %v944 = vadd.f32 0.0, %v943
    %v945 = vpop.f32.mrb[0].mxu0
    %946 = vmatprep.mubr.f32.mxu0 0.0
    %947 = vmatmul.mubr.f32.gmra.mrb[0].mxu0 %v806
    %v948 = vpop.f32.mrb[0].mxu0
    %v949 = vadd.f32 0.0, %v948
    %v950 = vpop.f32.mrb[0].mxu0
    %951 = vmatprep.mubr.f32.mxu0 0.0
    %952 = vmatmul.mubr.f32.gmra.mrb[0].mxu0 %v809
    %v953 = vpop.f32.mrb[0].mxu0
    %v954 = vadd.f32 0.0, %v953
    %v955 = vpop.f32.mrb[0].mxu0
    %956 = vmatprep.mubr.f32.mxu0 0.0
    %957 = vmatmul.mubr.f32.gmra.mrb[0].mxu0 %v812
    %v958 = vpop.f32.mrb[0].mxu0
    %v959 = vadd.f32 0.0, %v958
    %v960 = vpop.f32.mrb[0].mxu0
    %961 = vdwg.mxu0
    %v962 = vadd.f32 %v686, %v884
    %v963 = vadd.f32 %v691, %v889
    %v964 = vadd.f32 %v696, %v894
    %v965 = vadd.f32 %v701, %v899
    %v966 = vadd.f32 %v706, %v904
    %v967 = vadd.f32 %v711, %v909
    %v968 = vadd.f32 %v716, %v914
    %v969 = vadd.f32 %v721, %v919
    %v970 = vadd.f32 %v726, %v924
    %v971 = vadd.f32 %v731, %v929
    %v972 = vadd.f32 %v736, %v934
    %v973 = vadd.f32 %v741, %v939
    %v974 = vadd.f32 %v746, %v944
    %v975 = vadd.f32 %v751, %v949
    %v976 = vadd.f32 %v756, %v954
    %v977 = vadd.f32 %v761, %v959
    %v978 = vld [vmem:[%s2] sm:$0x1]
    %v980 = vlaneseq
    %v981 = vshrl.u32 %v980, 7
    %v982 = vsub.s32 0, %v981
    %v983 = vrot.slane %v978, %v982
    %v985 = vadd.f32 %v962, %v983
    %v986 = vadd.f32 %v963, %v983
    %v987 = vadd.f32 %v964, %v983
    %v988 = vadd.f32 %v965, %v983
    %v989 = vadd.f32 %v966, %v983
    %v990 = vadd.f32 %v967, %v983
    %v991 = vadd.f32 %v968, %v983
    %v992 = vadd.f32 %v969, %v983
    %v993 = vadd.f32 %v970, %v983
    %v994 = vadd.f32 %v971, %v983
    %v995 = vadd.f32 %v972, %v983
    %v996 = vadd.f32 %v973, %v983
    %v997 = vadd.f32 %v974, %v983
    %v998 = vadd.f32 %v975, %v983
    %v999 = vadd.f32 %v976, %v983
    %v1000 = vadd.f32 %v977, %v983
    %v1001 = vmax.f32 %v985, 0.0
    %v1002 = vmax.f32 %v986, 0.0
    %v1003 = vmax.f32 %v987, 0.0
    %v1004 = vmax.f32 %v988, 0.0
    %v1005 = vmax.f32 %v989, 0.0
    %v1006 = vmax.f32 %v990, 0.0
    %v1007 = vmax.f32 %v991, 0.0
    %v1008 = vmax.f32 %v992, 0.0
    %v1009 = vmax.f32 %v993, 0.0
    %v1010 = vmax.f32 %v994, 0.0
    %v1011 = vmax.f32 %v995, 0.0
    %v1012 = vmax.f32 %v996, 0.0
    %v1013 = vmax.f32 %v997, 0.0
    %v1014 = vmax.f32 %v998, 0.0
    %v1015 = vmax.f32 %v999, 0.0
    %v1016 = vmax.f32 %v1000, 0.0
    %vm1017 = vcmask 64512
    %1018 = vst.msk [vmem:[#allocation3] sm:$0xff] %vm1017, %v1001
    %1019 = vst.msk [vmem:[#allocation3 + $0x8] sm:$0xff] %vm1017, %v1002
    %1020 = vst.msk [vmem:[#allocation3 + $0x10] sm:$0xff] %vm1017, %v1003
    %1021 = vst.msk [vmem:[#allocation3 + $0x18] sm:$0xff] %vm1017, %v1004
    %1022 = vst.msk [vmem:[#allocation3 + $0x20] sm:$0xff] %vm1017, %v1005
    %1023 = vst.msk [vmem:[#allocation3 + $0x28] sm:$0xff] %vm1017, %v1006
    %1024 = vst.msk [vmem:[#allocation3 + $0x30] sm:$0xff] %vm1017, %v1007
    %1025 = vst.msk [vmem:[#allocation3 + $0x38] sm:$0xff] %vm1017, %v1008
    %1026 = vst.msk [vmem:[#allocation3 + $0x40] sm:$0xff] %vm1017, %v1009
    %1027 = vst.msk [vmem:[#allocation3 + $0x48] sm:$0xff] %vm1017, %v1010
    %1028 = vst.msk [vmem:[#allocation3 + $0x50] sm:$0xff] %vm1017, %v1011
    %1029 = vst.msk [vmem:[#allocation3 + $0x58] sm:$0xff] %vm1017, %v1012
    %1030 = vst.msk [vmem:[#allocation3 + $0x60] sm:$0xff] %vm1017, %v1013
    %1031 = vst.msk [vmem:[#allocation3 + $0x68] sm:$0xff] %vm1017, %v1014
    %1032 = vst.msk [vmem:[#allocation3 + $0x70] sm:$0xff] %vm1017, %v1015
    %1033 = vst.msk [vmem:[#allocation3 + $0x78] sm:$0xff] %vm1017, %v1016
    %v1034 = vld [vmem:[#allocation3] ss:$2 sm:$0xff]
    %s1035 = scalar_lea.vmem [#allocation3], 16
    %v1036 = vld [vmem:[%s1035] ss:$2 sm:$0xff]
    %s1037 = scalar_lea.vmem [#allocation3], 32
    %v1038 = vld [vmem:[%s1037] ss:$2 sm:$0xff]
    %s1039 = scalar_lea.vmem [#allocation3], 48
    %v1040 = vld [vmem:[%s1039] ss:$2 sm:$0xff]
    %s1041 = scalar_lea.vmem [#allocation3], 64
    %v1042 = vld [vmem:[%s1041] ss:$2 sm:$0xff]
    %s1043 = scalar_lea.vmem [#allocation3], 80
    %v1044 = vld [vmem:[%s1043] ss:$2 sm:$0xff]
    %s1045 = scalar_lea.vmem [#allocation3], 96
    %v1046 = vld [vmem:[%s1045] ss:$2 sm:$0xff]
    %s1047 = scalar_lea.vmem [#allocation3], 112
    %v1048 = vld [vmem:[%s1047] ss:$2 sm:$0xff]
    %s1049 = scalar_lea.vmem [#allocation3], 1
    %v1050 = vld [vmem:[%s1049] ss:$2 sm:$0xff]
    %s1051 = scalar_lea.vmem [#allocation3], 17
    %v1052 = vld [vmem:[%s1051] ss:$2 sm:$0xff]
    %s1053 = scalar_lea.vmem [#allocation3], 33
    %v1054 = vld [vmem:[%s1053] ss:$2 sm:$0xff]
    %s1055 = scalar_lea.vmem [#allocation3], 49
    %v1056 = vld [vmem:[%s1055] ss:$2 sm:$0xff]
    %s1057 = scalar_lea.vmem [#allocation3], 65
    %v1058 = vld [vmem:[%s1057] ss:$2 sm:$0xff]
    %s1059 = scalar_lea.vmem [#allocation3], 81
    %v1060 = vld [vmem:[%s1059] ss:$2 sm:$0xff]
    %s1061 = scalar_lea.vmem [#allocation3], 97
    %v1062 = vld [vmem:[%s1061] ss:$2 sm:$0xff]
    %s1063 = scalar_lea.vmem [#allocation3], 113
    %v1064 = vld [vmem:[%s1063] ss:$2 sm:$0xff]
    %v1065 = vmax.f32 %v1034, %v1050
    %v1066 = vmax.f32 %v1036, %v1052
    %v1067 = vmax.f32 %v1038, %v1054
    %v1068 = vmax.f32 %v1040, %v1056
    %v1069 = vmax.f32 %v1042, %v1058
    %v1070 = vmax.f32 %v1044, %v1060
    %v1071 = vmax.f32 %v1046, %v1062
    %v1072 = vmax.f32 %v1048, %v1064
    %vm1073 = vcmask 57344
    %1074 = vst.msk [vmem:[#allocation4] sm:$0x1] %vm1073, 0.0
    %1075 = vst.msk [vmem:[#allocation4 + $0x41] sm:$0x1] %vm1073, 0.0
    %1076 = vst.msk [vmem:[#allocation4 + $0x1] sm:$0xff] %vm1017, %v1065
    %1077 = vst.msk [vmem:[#allocation4 + $0x9] sm:$0xff] %vm1017, %v1066
    %1078 = vst.msk [vmem:[#allocation4 + $0x11] sm:$0xff] %vm1017, %v1067
    %1079 = vst.msk [vmem:[#allocation4 + $0x19] sm:$0xff] %vm1017, %v1068
    %1080 = vst.msk [vmem:[#allocation4 + $0x21] sm:$0xff] %vm1017, %v1069
    %1081 = vst.msk [vmem:[#allocation4 + $0x29] sm:$0xff] %vm1017, %v1070
    %1082 = vst.msk [vmem:[#allocation4 + $0x31] sm:$0xff] %vm1017, %v1071
    %1083 = vst.msk [vmem:[#allocation4 + $0x39] sm:$0xff] %vm1017, %v1072
    %vm1084 = vcmp.lt.s32.totalorder %v64, 0
    %v1085 = vsub.s32 0, %v64
    %v1086 = vsel %vm1084, %v1085, %v64
    %v1087 = vshrl.u32 %v1086, 3
    %v1088 = vand.u32 %v1086, 7
    %v1089 = vsub.s32 0, %v1088
    %v1090 = vsel %vm1084, %v1089, %v1088
    %vm1091 = vcmp.lt.s32.totalorder %v65, 0
    %v1092 = vsub.s32 0, %v65
    %v1093 = vsel %vm1091, %v1092, %v65
    %v1094 = vshrl.u32 %v1093, 3
    %v1095 = vand.u32 %v1093, 7
    %v1096 = vsub.s32 0, %v1095
    %v1097 = vsel %vm1091, %v1096, %v1095
    %vm1098 = vcmp.lt.s32.totalorder %v66, 0
    %v1099 = vsub.s32 0, %v66
    %v1100 = vsel %vm1098, %v1099, %v66
    %v1101 = vshrl.u32 %v1100, 3
    %v1102 = vand.u32 %v1100, 7
    %v1103 = vsub.s32 0, %v1102
    %v1104 = vsel %vm1098, %v1103, %v1102
    %vm1105 = vcmp.lt.s32.totalorder %v67, 0
    %v1106 = vsub.s32 0, %v67
    %v1107 = vsel %vm1105, %v1106, %v67
    %v1108 = vshrl.u32 %v1107, 3
    %v1109 = vand.u32 %v1107, 7
    %v1110 = vsub.s32 0, %v1109
    %v1111 = vsel %vm1105, %v1110, %v1109
    %vm1112 = vcmp.lt.s32.totalorder %v68, 0
    %v1113 = vsub.s32 0, %v68
    %v1114 = vsel %vm1112, %v1113, %v68
    %v1115 = vshrl.u32 %v1114, 3
    %v1116 = vand.u32 %v1114, 7
    %v1117 = vsub.s32 0, %v1116
    %v1118 = vsel %vm1112, %v1117, %v1116
    %vm1119 = vcmp.lt.s32.totalorder %v69, 0
    %v1120 = vsub.s32 0, %v69
    %v1121 = vsel %vm1119, %v1120, %v69
    %v1122 = vshrl.u32 %v1121, 3
    %v1123 = vand.u32 %v1121, 7
    %v1124 = vsub.s32 0, %v1123
    %v1125 = vsel %vm1119, %v1124, %v1123
    %vm1126 = vcmp.lt.s32.totalorder %v70, 0
    %v1127 = vsub.s32 0, %v70
    %v1128 = vsel %vm1126, %v1127, %v70
    %v1129 = vshrl.u32 %v1128, 3
    %v1130 = vand.u32 %v1128, 7
    %v1131 = vsub.s32 0, %v1130
    %v1132 = vsel %vm1126, %v1131, %v1130
    %vm1133 = vcmp.lt.s32.totalorder %v71, 0
    %v1134 = vsub.s32 0, %v71
    %v1135 = vsel %vm1133, %v1134, %v71
    %v1136 = vshrl.u32 %v1135, 3
    %v1137 = vand.u32 %v1135, 7
    %v1138 = vsub.s32 0, %v1137
    %v1139 = vsel %vm1133, %v1138, %v1137
    %vm1140 = vcmp.ne.s32.totalorder %v1090, 0
    %vm1141 = vcmp.ne.s32.totalorder %v1097, 0
    %vm1142 = vcmp.ne.s32.totalorder %v1104, 0
    %vm1143 = vcmp.ne.s32.totalorder %v1111, 0
    %vm1144 = vcmp.ne.s32.totalorder %v1118, 0
    %vm1145 = vcmp.ne.s32.totalorder %v1125, 0
    %vm1146 = vcmp.ne.s32.totalorder %v1132, 0
    %vm1147 = vcmp.ne.s32.totalorder %v1139, 0
    %vm1148 = vcmp.lt.s32.totalorder %v1090, 0
    %vm1149 = vcmp.lt.s32.totalorder %v1097, 0
    %vm1150 = vcmp.lt.s32.totalorder %v1104, 0
    %vm1151 = vcmp.lt.s32.totalorder %v1111, 0
    %vm1152 = vcmp.lt.s32.totalorder %v1118, 0
    %vm1153 = vcmp.lt.s32.totalorder %v1125, 0
    %vm1154 = vcmp.lt.s32.totalorder %v1132, 0
    %vm1155 = vcmp.lt.s32.totalorder %v1139, 0
    %vm1156 = vmand %vm1148, %vm1140
    %vm1157 = vmand %vm1149, %vm1141
    %vm1158 = vmand %vm1150, %vm1142
    %vm1159 = vmand %vm1151, %vm1143
    %vm1160 = vmand %vm1152, %vm1144
    %vm1161 = vmand %vm1153, %vm1145
    %vm1162 = vmand %vm1154, %vm1146
    %vm1163 = vmand %vm1155, %vm1147
    %v1164 = vadd.s32 %v1090, 8
    %v1165 = vadd.s32 %v1097, 8
    %v1166 = vadd.s32 %v1104, 8
    %v1167 = vadd.s32 %v1111, 8
    %v1168 = vadd.s32 %v1118, 8
    %v1169 = vadd.s32 %v1125, 8
    %v1170 = vadd.s32 %v1132, 8
    %v1171 = vadd.s32 %v1139, 8
    %v1172 = vsel %vm1156, %v1164, %v1090
    %v1173 = vsel %vm1157, %v1165, %v1097
    %v1174 = vsel %vm1158, %v1166, %v1104
    %v1175 = vsel %vm1159, %v1167, %v1111
    %v1176 = vsel %vm1160, %v1168, %v1118
    %v1177 = vsel %vm1161, %v1169, %v1125
    %v1178 = vsel %vm1162, %v1170, %v1132
    %v1179 = vsel %vm1163, %v1171, %v1139
    %vm1180 = vcmp.ne.s32.totalorder %v1172, 0
    %vm1181 = vcmp.ne.s32.totalorder %v1173, 0
    %vm1182 = vcmp.ne.s32.totalorder %v1174, 0
    %vm1183 = vcmp.ne.s32.totalorder %v1175, 0
    %vm1184 = vcmp.ne.s32.totalorder %v1176, 0
    %vm1185 = vcmp.ne.s32.totalorder %v1177, 0
    %vm1186 = vcmp.ne.s32.totalorder %v1178, 0
    %vm1187 = vcmp.ne.s32.totalorder %v1179, 0
    %v1188 = vld [vmem:[#allocation4] sm:$0xff]
    %v1189 = vld [vmem:[#allocation4 + $0x8] sm:$0xff]
    %v1190 = vld [vmem:[#allocation4 + $0x10] sm:$0xff]
    %v1191 = vld [vmem:[#allocation4 + $0x18] sm:$0xff]
    %v1192 = vld [vmem:[#allocation4 + $0x20] sm:$0xff]
    %v1193 = vld [vmem:[#allocation4 + $0x28] sm:$0xff]
    %v1194 = vld [vmem:[#allocation4 + $0x30] sm:$0xff]
    %v1195 = vld [vmem:[#allocation4 + $0x38] sm:$0xff]
    %v1196 = vsel %vm1180, %v1188, 0.0
    %v1197 = vsel %vm1181, %v1189, 0.0
    %v1198 = vsel %vm1182, %v1190, 0.0
    %v1199 = vsel %vm1183, %v1191, 0.0
    %v1200 = vsel %vm1184, %v1192, 0.0
    %v1201 = vsel %vm1185, %v1193, 0.0
    %v1202 = vsel %vm1186, %v1194, 0.0
    %v1203 = vsel %vm1187, %v1195, 0.0
    %vm1204 = vcmp.ne.s32.totalorder %v1172, 7
    %vm1205 = vcmp.ne.s32.totalorder %v1173, 7
    %vm1206 = vcmp.ne.s32.totalorder %v1174, 7
    %vm1207 = vcmp.ne.s32.totalorder %v1175, 7
    %vm1208 = vcmp.ne.s32.totalorder %v1176, 7
    %vm1209 = vcmp.ne.s32.totalorder %v1177, 7
    %vm1210 = vcmp.ne.s32.totalorder %v1178, 7
    %vm1211 = vcmp.ne.s32.totalorder %v1179, 7
    %v1212 = vld [vmem:[#allocation4 + $0x2] sm:$0xff]
    %v1213 = vld [vmem:[#allocation4 + $0xa] sm:$0xff]
    %v1214 = vld [vmem:[#allocation4 + $0x12] sm:$0xff]
    %v1215 = vld [vmem:[#allocation4 + $0x1a] sm:$0xff]
    %v1216 = vld [vmem:[#allocation4 + $0x22] sm:$0xff]
    %v1217 = vld [vmem:[#allocation4 + $0x2a] sm:$0xff]
    %v1218 = vld [vmem:[#allocation4 + $0x32] sm:$0xff]
    %v1219 = vld [vmem:[#allocation4 + $0x3a] sm:$0xff]
    %v1220 = vsel %vm1204, %v1212, 0.0
    %v1221 = vsel %vm1205, %v1213, 0.0
    %v1222 = vsel %vm1206, %v1214, 0.0
    %v1223 = vsel %vm1207, %v1215, 0.0
    %v1224 = vsel %vm1208, %v1216, 0.0
    %v1225 = vsel %vm1209, %v1217, 0.0
    %v1226 = vsel %vm1210, %v1218, 0.0
    %v1227 = vsel %vm1211, %v1219, 0.0
    %v1228 = vld [vmem:[%s3] sm:$0xff]
    %s1229 = scalar_lea.vmem %s3, 8
    %v1230 = vld [vmem:[%s1229] sm:$0xff]
    %v1232 = vsel %vm1017, %v1065, 0
    %v1235 = vsel %vm1017, %v1066, 0
    %v1238 = vsel %vm1017, %v1067, 0
    %v1241 = vsel %vm1017, %v1068, 0
    %v1244 = vsel %vm1017, %v1069, 0
    %v1247 = vsel %vm1017, %v1070, 0
    %v1250 = vsel %vm1017, %v1071, 0
    %v1253 = vsel %vm1017, %v1072, 0
    %1255 = vmatprep.subr.mxu0 0.0
    %1256 = vmatpush1.msra.mxu0 %v1230
    %1257 = vmatprep.subr.mxu0 0.0
    %1258 = vmatpush1.msra.mxu0 0.0
    %1259 = vmatprep.subr.mxu0 0.0
    %1260 = vmatpush1.msra.mxu0 0.0
    %1261 = vmatprep.subr.mxu0 0.0
    %1262 = vmatpush1.msra.mxu0 0.0
    %1263 = vmatprep.subr.mxu0 0.0
    %1264 = vmatpush1.msra.mxu0 0.0
    %1265 = vmatprep.subr.mxu0 0.0
    %1266 = vmatpush1.msra.mxu0 0.0
    %1267 = vmatprep.subr.mxu0 0.0
    %1268 = vmatpush1.msra.mxu0 0.0
    %1269 = vmatprep.subr.mxu0 0.0
    %1270 = vmatpush1.msra.mxu0 0.0
    %1271 = vmatprep.subr.mxu0 0.0
    %1272 = vmatpush1.msra.mxu0 0.0
    %1273 = vmatprep.subr.mxu0 0.0
    %1274 = vmatpush1.msra.mxu0 0.0
    %1275 = vmatprep.subr.mxu0 0.0
    %1276 = vmatpush1.msra.mxu0 0.0
    %1277 = vmatprep.subr.mxu0 0.0
    %1278 = vmatpush1.msra.mxu0 0.0
    %1279 = vmatprep.subr.mxu0 0.0
    %1280 = vmatpush1.msra.mxu0 0.0
    %1281 = vmatprep.subr.mxu0 0.0
    %1282 = vmatpush1.msra.mxu0 0.0
    %1283 = vmatprep.subr.mxu0 0.0
    %1284 = vmatpush1.msra.mxu0 0.0
    %1285 = vmatprep.subr.mxu0 0.0
    %1286 = vmatpush1.msra.mxu0 0.0
    %1287 = vmatprep.subr.mxu0 0.0
    %1288 = vmatpush1.msra.mxu0 0.0
    %1289 = vmatprep.subr.mxu0 0.0
    %1290 = vmatpush1.msra.mxu0 0.0
    %1291 = vmatprep.subr.mxu0 0.0
    %1292 = vmatpush1.msra.mxu0 0.0
    %1293 = vmatprep.subr.mxu0 0.0
    %1294 = vmatpush1.msra.mxu0 0.0
    %1295 = vmatprep.subr.mxu0 0.0
    %1296 = vmatpush1.msra.mxu0 0.0
    %1297 = vmatprep.subr.mxu0 0.0
    %1298 = vmatpush1.msra.mxu0 0.0
    %1299 = vmatprep.subr.mxu0 0.0
    %1300 = vmatpush1.msra.mxu0 0.0
    %1301 = vmatprep.subr.mxu0 0.0
    %1302 = vmatpush1.msra.mxu0 0.0
    %1303 = vmatprep.subr.mxu0 0.0
    %1304 = vmatpush1.msra.mxu0 0.0
    %1305 = vmatprep.subr.mxu0 0.0
    %1306 = vmatpush1.msra.mxu0 0.0
    %1307 = vmatprep.subr.mxu0 0.0
    %1308 = vmatpush1.msra.mxu0 0.0
    %1309 = vmatprep.subr.mxu0 0.0
    %1310 = vmatpush1.msra.mxu0 0.0
    %1311 = vmatprep.subr.mxu0 0.0
    %1312 = vmatpush1.msra.mxu0 0.0
    %1313 = vmatprep.subr.mxu0 0.0
    %1314 = vmatpush1.msra.mxu0 0.0
    %1315 = vmatprep.subr.mxu0 0.0
    %1316 = vmatpush1.msra.mxu0 0.0
    %1317 = vmatprep.subr.mxu0 0.0
    %1318 = vmatpush1.msra.mxu0 0.0
    %1319 = vmatprep.mubr.f32.mxu0 0.0
    %1320 = vmatmul.mubr.f32.gmra.mrb[0].mxu0 %v1232
    %v1321 = vpop.f32.mrb[0].mxu0
    %v1322 = vadd.f32 0.0, %v1321
    %v1323 = vpop.f32.mrb[0].mxu0
    %1324 = vmatprep.mubr.f32.mxu0 0.0
    %1325 = vmatmul.mubr.f32.gmra.mrb[0].mxu0 %v1235
    %v1326 = vpop.f32.mrb[0].mxu0
    %v1327 = vadd.f32 0.0, %v1326
    %v1328 = vpop.f32.mrb[0].mxu0
    %1329 = vmatprep.mubr.f32.mxu0 0.0
    %1330 = vmatmul.mubr.f32.gmra.mrb[0].mxu0 %v1238
    %v1331 = vpop.f32.mrb[0].mxu0
    %v1332 = vadd.f32 0.0, %v1331
    %v1333 = vpop.f32.mrb[0].mxu0
    %1334 = vmatprep.mubr.f32.mxu0 0.0
    %1335 = vmatmul.mubr.f32.gmra.mrb[0].mxu0 %v1241
    %v1336 = vpop.f32.mrb[0].mxu0
    %v1337 = vadd.f32 0.0, %v1336
    %v1338 = vpop.f32.mrb[0].mxu0
    %1339 = vmatprep.mubr.f32.mxu0 0.0
    %1340 = vmatmul.mubr.f32.gmra.mrb[0].mxu0 %v1244
    %v1341 = vpop.f32.mrb[0].mxu0
    %v1342 = vadd.f32 0.0, %v1341
    %v1343 = vpop.f32.mrb[0].mxu0
    %1344 = vmatprep.mubr.f32.mxu0 0.0
    %1345 = vmatmul.mubr.f32.gmra.mrb[0].mxu0 %v1247
    %v1346 = vpop.f32.mrb[0].mxu0
    %v1347 = vadd.f32 0.0, %v1346
    %v1348 = vpop.f32.mrb[0].mxu0
    %1349 = vmatprep.mubr.f32.mxu0 0.0
    %1350 = vmatmul.mubr.f32.gmra.mrb[0].mxu0 %v1250
    %v1351 = vpop.f32.mrb[0].mxu0
    %v1352 = vadd.f32 0.0, %v1351
    %v1353 = vpop.f32.mrb[0].mxu0
    %1354 = vmatprep.mubr.f32.mxu0 0.0
    %1355 = vmatmul.mubr.f32.gmra.mrb[0].mxu0 %v1253
    %v1356 = vpop.f32.mrb[0].mxu0
    %v1357 = vadd.f32 0.0, %v1356
    %v1358 = vpop.f32.mrb[0].mxu0
    %1359 = vdwg.mxu0
    %v1361 = vsel %vm1017, %v1196, 0
    %v1364 = vsel %vm1017, %v1197, 0
    %v1367 = vsel %vm1017, %v1198, 0
    %v1370 = vsel %vm1017, %v1199, 0
    %v1373 = vsel %vm1017, %v1200, 0
    %v1376 = vsel %vm1017, %v1201, 0
    %v1379 = vsel %vm1017, %v1202, 0
    %v1382 = vsel %vm1017, %v1203, 0
    %1384 = vmatprep.subr.mxu0 0.0
    %1385 = vmatpush1.msra.mxu0 %v1228
    %1386 = vmatprep.subr.mxu0 0.0
    %1387 = vmatpush1.msra.mxu0 0.0
    %1388 = vmatprep.subr.mxu0 0.0
    %1389 = vmatpush1.msra.mxu0 0.0
    %1390 = vmatprep.subr.mxu0 0.0
    %1391 = vmatpush1.msra.mxu0 0.0
    %1392 = vmatprep.subr.mxu0 0.0
    %1393 = vmatpush1.msra.mxu0 0.0
    %1394 = vmatprep.subr.mxu0 0.0
    %1395 = vmatpush1.msra.mxu0 0.0
    %1396 = vmatprep.subr.mxu0 0.0
    %1397 = vmatpush1.msra.mxu0 0.0
    %1398 = vmatprep.subr.mxu0 0.0
    %1399 = vmatpush1.msra.mxu0 0.0
    %1400 = vmatprep.subr.mxu0 0.0
    %1401 = vmatpush1.msra.mxu0 0.0
    %1402 = vmatprep.subr.mxu0 0.0
    %1403 = vmatpush1.msra.mxu0 0.0
    %1404 = vmatprep.subr.mxu0 0.0
    %1405 = vmatpush1.msra.mxu0 0.0
    %1406 = vmatprep.subr.mxu0 0.0
    %1407 = vmatpush1.msra.mxu0 0.0
    %1408 = vmatprep.subr.mxu0 0.0
    %1409 = vmatpush1.msra.mxu0 0.0
    %1410 = vmatprep.subr.mxu0 0.0
    %1411 = vmatpush1.msra.mxu0 0.0
    %1412 = vmatprep.subr.mxu0 0.0
    %1413 = vmatpush1.msra.mxu0 0.0
    %1414 = vmatprep.subr.mxu0 0.0
    %1415 = vmatpush1.msra.mxu0 0.0
    %1416 = vmatprep.subr.mxu0 0.0
    %1417 = vmatpush1.msra.mxu0 0.0
    %1418 = vmatprep.subr.mxu0 0.0
    %1419 = vmatpush1.msra.mxu0 0.0
    %1420 = vmatprep.subr.mxu0 0.0
    %1421 = vmatpush1.msra.mxu0 0.0
    %1422 = vmatprep.subr.mxu0 0.0
    %1423 = vmatpush1.msra.mxu0 0.0
    %1424 = vmatprep.subr.mxu0 0.0
    %1425 = vmatpush1.msra.mxu0 0.0
    %1426 = vmatprep.subr.mxu0 0.0
    %1427 = vmatpush1.msra.mxu0 0.0
    %1428 = vmatprep.subr.mxu0 0.0
    %1429 = vmatpush1.msra.mxu0 0.0
    %1430 = vmatprep.subr.mxu0 0.0
    %1431 = vmatpush1.msra.mxu0 0.0
    %1432 = vmatprep.subr.mxu0 0.0
    %1433 = vmatpush1.msra.mxu0 0.0
    %1434 = vmatprep.subr.mxu0 0.0
    %1435 = vmatpush1.msra.mxu0 0.0
    %1436 = vmatprep.subr.mxu0 0.0
    %1437 = vmatpush1.msra.mxu0 0.0
    %1438 = vmatprep.subr.mxu0 0.0
    %1439 = vmatpush1.msra.mxu0 0.0
    %1440 = vmatprep.subr.mxu0 0.0
    %1441 = vmatpush1.msra.mxu0 0.0
    %1442 = vmatprep.subr.mxu0 0.0
    %1443 = vmatpush1.msra.mxu0 0.0
    %1444 = vmatprep.subr.mxu0 0.0
    %1445 = vmatpush1.msra.mxu0 0.0
    %1446 = vmatprep.subr.mxu0 0.0
    %1447 = vmatpush1.msra.mxu0 0.0
    %1448 = vmatprep.mubr.f32.mxu0 0.0
    %1449 = vmatmul.mubr.f32.gmra.mrb[0].mxu0 %v1361
    %v1450 = vpop.f32.mrb[0].mxu0
    %v1451 = vadd.f32 %v1322, %v1450
    %v1452 = vpop.f32.mrb[0].mxu0
    %1453 = vmatprep.mubr.f32.mxu0 0.0
    %1454 = vmatmul.mubr.f32.gmra.mrb[0].mxu0 %v1364
    %v1455 = vpop.f32.mrb[0].mxu0
    %v1456 = vadd.f32 %v1327, %v1455
    %v1457 = vpop.f32.mrb[0].mxu0
    %1458 = vmatprep.mubr.f32.mxu0 0.0
    %1459 = vmatmul.mubr.f32.gmra.mrb[0].mxu0 %v1367
    %v1460 = vpop.f32.mrb[0].mxu0
    %v1461 = vadd.f32 %v1332, %v1460
    %v1462 = vpop.f32.mrb[0].mxu0
    %1463 = vmatprep.mubr.f32.mxu0 0.0
    %1464 = vmatmul.mubr.f32.gmra.mrb[0].mxu0 %v1370
    %v1465 = vpop.f32.mrb[0].mxu0
    %v1466 = vadd.f32 %v1337, %v1465
    %v1467 = vpop.f32.mrb[0].mxu0
    %1468 = vmatprep.mubr.f32.mxu0 0.0
    %1469 = vmatmul.mubr.f32.gmra.mrb[0].mxu0 %v1373
    %v1470 = vpop.f32.mrb[0].mxu0
    %v1471 = vadd.f32 %v1342, %v1470
    %v1472 = vpop.f32.mrb[0].mxu0
    %1473 = vmatprep.mubr.f32.mxu0 0.0
    %1474 = vmatmul.mubr.f32.gmra.mrb[0].mxu0 %v1376
    %v1475 = vpop.f32.mrb[0].mxu0
    %v1476 = vadd.f32 %v1347, %v1475
    %v1477 = vpop.f32.mrb[0].mxu0
    %1478 = vmatprep.mubr.f32.mxu0 0.0
    %1479 = vmatmul.mubr.f32.gmra.mrb[0].mxu0 %v1379
    %v1480 = vpop.f32.mrb[0].mxu0
    %v1481 = vadd.f32 %v1352, %v1480
    %v1482 = vpop.f32.mrb[0].mxu0
    %1483 = vmatprep.mubr.f32.mxu0 0.0
    %1484 = vmatmul.mubr.f32.gmra.mrb[0].mxu0 %v1382
    %v1485 = vpop.f32.mrb[0].mxu0
    %v1486 = vadd.f32 %v1357, %v1485
    %v1487 = vpop.f32.mrb[0].mxu0
    %1488 = vdwg.mxu0
    %s1489 = scalar_lea.vmem %s3, 16
    %v1490 = vld [vmem:[%s1489] sm:$0xff]
    %v1492 = vsel %vm1017, %v1220, 0
    %v1495 = vsel %vm1017, %v1221, 0
    %v1498 = vsel %vm1017, %v1222, 0
    %v1501 = vsel %vm1017, %v1223, 0
    %v1504 = vsel %vm1017, %v1224, 0
    %v1507 = vsel %vm1017, %v1225, 0
    %v1510 = vsel %vm1017, %v1226, 0
    %v1513 = vsel %vm1017, %v1227, 0
    %1515 = vmatprep.subr.mxu0 0.0
    %1516 = vmatpush1.msra.mxu0 %v1490
    %1517 = vmatprep.subr.mxu0 0.0
    %1518 = vmatpush1.msra.mxu0 0.0
    %1519 = vmatprep.subr.mxu0 0.0
    %1520 = vmatpush1.msra.mxu0 0.0
    %1521 = vmatprep.subr.mxu0 0.0
    %1522 = vmatpush1.msra.mxu0 0.0
    %1523 = vmatprep.subr.mxu0 0.0
    %1524 = vmatpush1.msra.mxu0 0.0
    %1525 = vmatprep.subr.mxu0 0.0
    %1526 = vmatpush1.msra.mxu0 0.0
    %1527 = vmatprep.subr.mxu0 0.0
    %1528 = vmatpush1.msra.mxu0 0.0
    %1529 = vmatprep.subr.mxu0 0.0
    %1530 = vmatpush1.msra.mxu0 0.0
    %1531 = vmatprep.subr.mxu0 0.0
    %1532 = vmatpush1.msra.mxu0 0.0
    %1533 = vmatprep.subr.mxu0 0.0
    %1534 = vmatpush1.msra.mxu0 0.0
    %1535 = vmatprep.subr.mxu0 0.0
    %1536 = vmatpush1.msra.mxu0 0.0
    %1537 = vmatprep.subr.mxu0 0.0
    %1538 = vmatpush1.msra.mxu0 0.0
    %1539 = vmatprep.subr.mxu0 0.0
    %1540 = vmatpush1.msra.mxu0 0.0
    %1541 = vmatprep.subr.mxu0 0.0
    %1542 = vmatpush1.msra.mxu0 0.0
    %1543 = vmatprep.subr.mxu0 0.0
    %1544 = vmatpush1.msra.mxu0 0.0
    %1545 = vmatprep.subr.mxu0 0.0
    %1546 = vmatpush1.msra.mxu0 0.0
    %1547 = vmatprep.subr.mxu0 0.0
    %1548 = vmatpush1.msra.mxu0 0.0
    %1549 = vmatprep.subr.mxu0 0.0
    %1550 = vmatpush1.msra.mxu0 0.0
    %1551 = vmatprep.subr.mxu0 0.0
    %1552 = vmatpush1.msra.mxu0 0.0
    %1553 = vmatprep.subr.mxu0 0.0
    %1554 = vmatpush1.msra.mxu0 0.0
    %1555 = vmatprep.subr.mxu0 0.0
    %1556 = vmatpush1.msra.mxu0 0.0
    %1557 = vmatprep.subr.mxu0 0.0
    %1558 = vmatpush1.msra.mxu0 0.0
    %1559 = vmatprep.subr.mxu0 0.0
    %1560 = vmatpush1.msra.mxu0 0.0
    %1561 = vmatprep.subr.mxu0 0.0
    %1562 = vmatpush1.msra.mxu0 0.0
    %1563 = vmatprep.subr.mxu0 0.0
    %1564 = vmatpush1.msra.mxu0 0.0
    %1565 = vmatprep.subr.mxu0 0.0
    %1566 = vmatpush1.msra.mxu0 0.0
    %1567 = vmatprep.subr.mxu0 0.0
    %1568 = vmatpush1.msra.mxu0 0.0
    %1569 = vmatprep.subr.mxu0 0.0
    %1570 = vmatpush1.msra.mxu0 0.0
    %1571 = vmatprep.subr.mxu0 0.0
    %1572 = vmatpush1.msra.mxu0 0.0
    %1573 = vmatprep.subr.mxu0 0.0
    %1574 = vmatpush1.msra.mxu0 0.0
    %1575 = vmatprep.subr.mxu0 0.0
    %1576 = vmatpush1.msra.mxu0 0.0
    %1577 = vmatprep.subr.mxu0 0.0
    %1578 = vmatpush1.msra.mxu0 0.0
    %1579 = vmatprep.mubr.f32.mxu0 0.0
    %1580 = vmatmul.mubr.f32.gmra.mrb[0].mxu0 %v1492
    %v1581 = vpop.f32.mrb[0].mxu0
    %v1582 = vadd.f32 0.0, %v1581
    %v1583 = vpop.f32.mrb[0].mxu0
    %1584 = vmatprep.mubr.f32.mxu0 0.0
    %1585 = vmatmul.mubr.f32.gmra.mrb[0].mxu0 %v1495
    %v1586 = vpop.f32.mrb[0].mxu0
    %v1587 = vadd.f32 0.0, %v1586
    %v1588 = vpop.f32.mrb[0].mxu0
    %1589 = vmatprep.mubr.f32.mxu0 0.0
    %1590 = vmatmul.mubr.f32.gmra.mrb[0].mxu0 %v1498
    %v1591 = vpop.f32.mrb[0].mxu0
    %v1592 = vadd.f32 0.0, %v1591
    %v1593 = vpop.f32.mrb[0].mxu0
    %1594 = vmatprep.mubr.f32.mxu0 0.0
    %1595 = vmatmul.mubr.f32.gmra.mrb[0].mxu0 %v1501
    %v1596 = vpop.f32.mrb[0].mxu0
    %v1597 = vadd.f32 0.0, %v1596
    %v1598 = vpop.f32.mrb[0].mxu0
    %1599 = vmatprep.mubr.f32.mxu0 0.0
    %1600 = vmatmul.mubr.f32.gmra.mrb[0].mxu0 %v1504
    %v1601 = vpop.f32.mrb[0].mxu0
    %v1602 = vadd.f32 0.0, %v1601
    %v1603 = vpop.f32.mrb[0].mxu0
    %1604 = vmatprep.mubr.f32.mxu0 0.0
    %1605 = vmatmul.mubr.f32.gmra.mrb[0].mxu0 %v1507
    %v1606 = vpop.f32.mrb[0].mxu0
    %v1607 = vadd.f32 0.0, %v1606
    %v1608 = vpop.f32.mrb[0].mxu0
    %1609 = vmatprep.mubr.f32.mxu0 0.0
    %1610 = vmatmul.mubr.f32.gmra.mrb[0].mxu0 %v1510
    %v1611 = vpop.f32.mrb[0].mxu0
    %v1612 = vadd.f32 0.0, %v1611
    %v1613 = vpop.f32.mrb[0].mxu0
    %1614 = vmatprep.mubr.f32.mxu0 0.0
    %1615 = vmatmul.mubr.f32.gmra.mrb[0].mxu0 %v1513
    %v1616 = vpop.f32.mrb[0].mxu0
    %v1617 = vadd.f32 0.0, %v1616
    %v1618 = vpop.f32.mrb[0].mxu0
    %1619 = vdwg.mxu0
    %v1620 = vadd.f32 %v1451, %v1582
    %v1621 = vadd.f32 %v1456, %v1587
    %v1622 = vadd.f32 %v1461, %v1592
    %v1623 = vadd.f32 %v1466, %v1597
    %v1624 = vadd.f32 %v1471, %v1602
    %v1625 = vadd.f32 %v1476, %v1607
    %v1626 = vadd.f32 %v1481, %v1612
    %v1627 = vadd.f32 %v1486, %v1617
    %v1628 = vld [vmem:[%s4] sm:$0x1]
    %v1630 = vlaneseq
    %v1631 = vshrl.u32 %v1630, 7
    %v1632 = vsub.s32 0, %v1631
    %v1633 = vrot.slane %v1628, %v1632
    %v1635 = vadd.f32 %v1620, %v1633
    %v1636 = vadd.f32 %v1621, %v1633
    %v1637 = vadd.f32 %v1622, %v1633
    %v1638 = vadd.f32 %v1623, %v1633
    %v1639 = vadd.f32 %v1624, %v1633
    %v1640 = vadd.f32 %v1625, %v1633
    %v1641 = vadd.f32 %v1626, %v1633
    %v1642 = vadd.f32 %v1627, %v1633
    %v1643 = vmax.f32 %v1635, 0.0
    %v1644 = vmax.f32 %v1636, 0.0
    %v1645 = vmax.f32 %v1637, 0.0
    %v1646 = vmax.f32 %v1638, 0.0
    %v1647 = vmax.f32 %v1639, 0.0
    %v1648 = vmax.f32 %v1640, 0.0
    %v1649 = vmax.f32 %v1641, 0.0
    %v1650 = vmax.f32 %v1642, 0.0
    %vm1651 = vcmask 130048
    %1652 = vst.msk [vmem:[#allocation5] sm:$0xff] %vm1651, %v1643
    %1653 = vst.msk [vmem:[#allocation5 + $0x8] sm:$0xff] %vm1651, %v1644
    %1654 = vst.msk [vmem:[#allocation5 + $0x10] sm:$0xff] %vm1651, %v1645
    %1655 = vst.msk [vmem:[#allocation5 + $0x18] sm:$0xff] %vm1651, %v1646
    %1656 = vst.msk [vmem:[#allocation5 + $0x20] sm:$0xff] %vm1651, %v1647
    %1657 = vst.msk [vmem:[#allocation5 + $0x28] sm:$0xff] %vm1651, %v1648
    %1658 = vst.msk [vmem:[#allocation5 + $0x30] sm:$0xff] %vm1651, %v1649
    %1659 = vst.msk [vmem:[#allocation5 + $0x38] sm:$0xff] %vm1651, %v1650
    %v1660 = vld [vmem:[#allocation5] ss:$8 sm:$0xf]
    %v1661 = vld [vmem:[#allocation5] ss:$8 sm:$0xf0]
    %v1662 = vor.u32 %v1660, %v1661
    %s1663 = scalar_lea.vmem [#allocation5], 1
    %v1664 = vld [vmem:[%s1663] ss:$8 sm:$0xf]
    %v1665 = vld [vmem:[%s1663] ss:$8 sm:$0xf0]
    %v1666 = vor.u32 %v1664, %v1665
    %v1667 = vadd.f32 %v1662, %v1666
    %s1668 = scalar_lea.vmem [#allocation5], 2
    %v1669 = vld [vmem:[%s1668] ss:$8 sm:$0xf]
    %v1670 = vld [vmem:[%s1668] ss:$8 sm:$0xf0]
    %v1671 = vor.u32 %v1669, %v1670
    %v1672 = vadd.f32 %v1667, %v1671
    %s1673 = scalar_lea.vmem [#allocation5], 3
    %v1674 = vld [vmem:[%s1673] ss:$8 sm:$0xf]
    %v1675 = vld [vmem:[%s1673] ss:$8 sm:$0xf0]
    %v1676 = vor.u32 %v1674, %v1675
    %v1677 = vadd.f32 %v1672, %v1676
    %s1678 = scalar_lea.vmem [#allocation5], 4
    %v1679 = vld [vmem:[%s1678] ss:$8 sm:$0xf]
    %v1680 = vld [vmem:[%s1678] ss:$8 sm:$0xf0]
    %v1681 = vor.u32 %v1679, %v1680
    %v1682 = vadd.f32 %v1677, %v1681
    %s1683 = scalar_lea.vmem [#allocation5], 5
    %v1684 = vld [vmem:[%s1683] ss:$8 sm:$0xf]
    %v1685 = vld [vmem:[%s1683] ss:$8 sm:$0xf0]
    %v1686 = vor.u32 %v1684, %v1685
    %v1687 = vadd.f32 %v1682, %v1686
    %s1688 = scalar_lea.vmem [#allocation5], 6
    %v1689 = vld [vmem:[%s1688] ss:$8 sm:$0xf]
    %v1690 = vld [vmem:[%s1688] ss:$8 sm:$0xf0]
    %v1691 = vor.u32 %v1689, %v1690
    %v1692 = vadd.f32 %v1687, %v1691
    %s1693 = scalar_lea.vmem [#allocation5], 7
    %v1694 = vld [vmem:[%s1693] ss:$8 sm:$0xf]
    %v1695 = vld [vmem:[%s1693] ss:$8 sm:$0xf0]
    %v1696 = vor.u32 %v1694, %v1695
    %v1697 = vadd.f32 %v1692, %v1696
    %v1698 = vmul.f32 %v1697, 0.125
    %v1699 = vld [vmem:[%s5] sm:$0xff]
    %v1700 = vld [vmem:[%s5 + $0x8] sm:$0xff]
    %v1701 = vld [vmem:[%s6] sm:$0x1]
    %v1703 = vlaneseq
    %v1704 = vshrl.u32 %v1703, 7
    %v1705 = vsub.s32 0, %v1704
    %v1706 = vrot.slane %v1701, %v1705
    %v1709 = vsel %vm1651, %v1698, 0
    %1711 = vmatprep.subr.mxu0 0.0
    %1712 = vmatpush1.msra.mxu0 %v1699
    %1713 = vmatprep.subr.mxu0 0.0
    %1714 = vmatpush1.msra.mxu0 %v1700
    %1715 = vmatprep.subr.mxu0 0.0
    %1716 = vmatpush1.msra.mxu0 0.0
    %1717 = vmatprep.subr.mxu0 0.0
    %1718 = vmatpush1.msra.mxu0 0.0
    %1719 = vmatprep.subr.mxu0 0.0
    %1720 = vmatpush1.msra.mxu0 0.0
    %1721 = vmatprep.subr.mxu0 0.0
    %1722 = vmatpush1.msra.mxu0 0.0
    %1723 = vmatprep.subr.mxu0 0.0
    %1724 = vmatpush1.msra.mxu0 0.0
    %1725 = vmatprep.subr.mxu0 0.0
    %1726 = vmatpush1.msra.mxu0 0.0
    %1727 = vmatprep.subr.mxu0 0.0
    %1728 = vmatpush1.msra.mxu0 0.0
    %1729 = vmatprep.subr.mxu0 0.0
    %1730 = vmatpush1.msra.mxu0 0.0
    %1731 = vmatprep.subr.mxu0 0.0
    %1732 = vmatpush1.msra.mxu0 0.0
    %1733 = vmatprep.subr.mxu0 0.0
    %1734 = vmatpush1.msra.mxu0 0.0
    %1735 = vmatprep.subr.mxu0 0.0
    %1736 = vmatpush1.msra.mxu0 0.0
    %1737 = vmatprep.subr.mxu0 0.0
    %1738 = vmatpush1.msra.mxu0 0.0
    %1739 = vmatprep.subr.mxu0 0.0
    %1740 = vmatpush1.msra.mxu0 0.0
    %1741 = vmatprep.subr.mxu0 0.0
    %1742 = vmatpush1.msra.mxu0 0.0
    %1743 = vmatprep.subr.mxu0 0.0
    %1744 = vmatpush1.msra.mxu0 0.0
    %1745 = vmatprep.subr.mxu0 0.0
    %1746 = vmatpush1.msra.mxu0 0.0
    %1747 = vmatprep.subr.mxu0 0.0
    %1748 = vmatpush1.msra.mxu0 0.0
    %1749 = vmatprep.subr.mxu0 0.0
    %1750 = vmatpush1.msra.mxu0 0.0
    %1751 = vmatprep.subr.mxu0 0.0
    %1752 = vmatpush1.msra.mxu0 0.0
    %1753 = vmatprep.subr.mxu0 0.0
    %1754 = vmatpush1.msra.mxu0 0.0
    %1755 = vmatprep.subr.mxu0 0.0
    %1756 = vmatpush1.msra.mxu0 0.0
    %1757 = vmatprep.subr.mxu0 0.0
    %1758 = vmatpush1.msra.mxu0 0.0
    %1759 = vmatprep.subr.mxu0 0.0
    %1760 = vmatpush1.msra.mxu0 0.0
    %1761 = vmatprep.subr.mxu0 0.0
    %1762 = vmatpush1.msra.mxu0 0.0
    %1763 = vmatprep.subr.mxu0 0.0
    %1764 = vmatpush1.msra.mxu0 0.0
    %1765 = vmatprep.subr.mxu0 0.0
    %1766 = vmatpush1.msra.mxu0 0.0
    %1767 = vmatprep.subr.mxu0 0.0
    %1768 = vmatpush1.msra.mxu0 0.0
    %1769 = vmatprep.subr.mxu0 0.0
    %1770 = vmatpush1.msra.mxu0 0.0
    %1771 = vmatprep.subr.mxu0 0.0
    %1772 = vmatpush1.msra.mxu0 0.0
    %1773 = vmatprep.subr.mxu0 0.0
    %1774 = vmatpush1.msra.mxu0 0.0
    %1775 = vmatprep.mubr.f32.mxu0 0.0
    %1776 = vmatmul.mubr.f32.gmra.mrb[0].mxu0 %v1709
    %v1777 = vpop.f32.mrb[0].mxu0
    %v1778 = vadd.f32 %v1706, %v1777
    %v1779 = vpop.f32.mrb[0].mxu0
    %1780 = vdwg.mxu0
    %vm1781 = vcmask 261120
    %1782 = vst.msk [vmem:[#allocation6] sm:$0xff] %vm1781, %v1778
    // Predicated region
    $region30: #{tpu_custom_call.1} parent=1 // pred_check
      _
    $region31: #{tpu_custom_call.1} parent=1 // pred_check_branch
      %1784 = sbr.rel (0) target = $region33
    $region32: #{tpu_custom_call.1} parent=1 // pred_region
      %s1786 = ssub.s32 128, 128
      %1787 = vsyncadd [#allocation7], %s1786
      %s1789 = sshll.u32 [#allocation6], 4
      %s1790 = int_to_ptr.vmem [resolvable:$true] %s1789
      %1792 = dma.vmem_to_hbm [thread:$0]  %s1790, 128, %s7, [#allocation7]
    $region33: #{tpu_custom_call.1} parent=1 // pred_fallthru
      _
    // Predicated region
    $region34: #{tpu_custom_call.1} parent=1 // pred_check
      _
    $region35: #{tpu_custom_call.1} parent=1 // pred_check_branch
      %1794 = sbr.rel (0) target = $region37
    $region36: #{tpu_custom_call.1} parent=1 // pred_region
      %1795 = dma.done [#allocation7], 128
    $region37: #{tpu_custom_call.1} parent=1 // pred_fallthru
      _
    %1796 = vsyncpa [#allocation7], 1

</llo_original>
